<compile_context>
chip_gen: v5e
topology: v5e:2x2
jax: 0.10.0
libtpu: 0.0.40
codegen_flags: <defaults>
</compile_context>

<pallas_src>
import functools

import jax
import jax.numpy as jnp
from jax.experimental import pallas as pl
from jax.experimental.pallas import tpu as pltpu


_LANE = 128          # lane width of a vreg; batch is laid out along lanes
_SUB = 8             # sublane rows per inner compute step (one f32 vreg)

# Offsets into the packed parameter slab (PyTorch (out, in) row-major order).
_W1_OFF, _B1_OFF = 0, 32            # fc1: (16, 2) weight, (16,) bias
_W2_OFF, _B2_OFF = 48, 176          # fc2: (8, 16) weight, (8,) bias
_W3_OFF, _B3_OFF = 184, 192         # fc3: (1, 8)  weight, (1,)  bias
_N_PARAMS = 193


def _make_kernel(tile_rows):
    """Kernel for one (2, tile_rows, 128) x-tile -> (tile_rows, 128) out-tile."""
    sub = min(_SUB, tile_rows)          # rows per inner step (keeps ~27 vregs live)
    n_sub = tile_rows // sub            # tile_rows is either <= 8 or a multiple of 8

    def kernel(p_ref, x_ref, o_ref):
        # p_ref: (193,) f32 in SMEM (packed fc1/fc2/fc3 weights + biases)
        # x_ref: (2, tile_rows, 128) f32 in VMEM   (feature, batch-rows, batch-lanes)
        # o_ref: (tile_rows, 128)    f32 in VMEM
        for s in range(n_sub):                       # unrolled, static
            r0 = s * sub
            x0 = x_ref[0, r0:r0 + sub, :]            # (sub, 128) lane-dense
            x1 = x_ref[1, r0:r0 + sub, :]

            # fc1 (2 -> 16) + ReLU: unrolled VPU FMAs, weights as SMEM scalars.
            h1 = []
            for o in range(16):
                acc = (p_ref[_W1_OFF + 2 * o] * x0
                       + p_ref[_W1_OFF + 2 * o + 1] * x1
                       + p_ref[_B1_OFF + o])
                h1.append(jnp.maximum(acc, 0.0))
            # dropout1: identity in eval mode

            # fc2 (16 -> 8) + ReLU
            h2 = []
            for o in range(8):
                acc = p_ref[_W2_OFF + 16 * o] * h1[0]
                for k in range(1, 16):
                    acc = acc + p_ref[_W2_OFF + 16 * o + k] * h1[k]
                h2.append(jnp.maximum(acc + p_ref[_B2_OFF + o], 0.0))
            # dropout2: identity in eval mode

            # fc3 (8 -> 1) + sigmoid (exp + approx reciprocal both on the EUP)
            z = p_ref[_W3_OFF] * h2[0]
            for k in range(1, 8):
                z = z + p_ref[_W3_OFF + k] * h2[k]
            z = z + p_ref[_B3_OFF]
            o_ref[r0:r0 + sub, :] = pl.reciprocal(1.0 + jnp.exp(-z), approx=True)

    return kernel


@functools.partial(jax.jit, static_argnames=("block_rows",))
def dual_branch_forward(x, packed_params, *, block_rows=64):
    """x: (B, 2) float32, packed_params: (193,) float32 -> (B, 1) float32."""
    assert block_rows % _SUB == 0
    B = x.shape[0]

    # Batch -> (rows, 128) lane-dense layout.
    n_rows = pl.cdiv(B, _LANE)
    if n_rows <= _SUB:
        tile_rows = n_rows                               # single small tile
    else:
        tile_rows = min(block_rows, _SUB * pl.cdiv(n_rows, _SUB))
    n_rows_p = pl.cdiv(n_rows, tile_rows) * tile_rows    # pad rows to tile multiple
    b_pad = n_rows_p * _LANE

    x_pad = jnp.zeros((b_pad, 2), jnp.float32).at[:B, :].set(x.astype(jnp.float32))
    # (B, 2) -> (2, rows, 128): features on sublanes of dim 0, batch on lanes.
    x_t = x_pad.T.reshape(2, n_rows_p, _LANE)

    out = pl.pallas_call(
        _make_kernel(tile_rows),
        out_shape=jax.ShapeDtypeStruct((n_rows_p, _LANE), jnp.float32),
        grid=(n_rows_p // tile_rows,),
        in_specs=[
            # One DMA for all parameters; stays resident across grid steps.
            pl.BlockSpec(memory_space=pltpu.SMEM),
            pl.BlockSpec((2, tile_rows, _LANE), lambda i: (0, i, 0)),
        ],
        out_specs=pl.BlockSpec((tile_rows, _LANE), lambda i: (i, 0)),
        compiler_params=pltpu.CompilerParams(
            # Batch tiles are independent -> shard across v7x's 2 TensorCores.
            dimension_semantics=("parallel",)),
    )(packed_params, x_t)

    return out.reshape(b_pad, 1)[:B]


def init_params(key):
    """PyTorch-style (uniform +-1/sqrt(fan_in)) init; weights in (out, in) layout."""
    def linear(key, fan_in, fan_out):
        kw, kb = jax.random.split(key)
        bound = 1.0 / jnp.sqrt(fan_in)
        w = jax.random.uniform(kw, (fan_out, fan_in), jnp.float32, -bound, bound)
        b = jax.random.uniform(kb, (fan_out,), jnp.float32, -bound, bound)
        return w, b

    k1, k2, k3 = jax.random.split(key, 3)
    w1, b1 = linear(k1, 2, 16)
    w2, b2 = linear(k2, 16, 8)
    w3, b3 = linear(k3, 8, 1)
    return (w1, b1, w2, b2, w3, b3)


def pack_params(params):
    """Flatten all weights/biases into one 193-float slab for a single SMEM DMA."""
    w1, b1, w2, b2, w3, b3 = params
    packed = jnp.concatenate([
        w1.reshape(-1), b1.reshape(-1),
        w2.reshape(-1), b2.reshape(-1),
        w3.reshape(-1), b3.reshape(-1),
    ]).astype(jnp.float32)
    assert packed.shape == (_N_PARAMS,)
    return packed


def reference_forward(x, params):
    """Pure-JAX reference (PyTorch convention) for correctness checking."""
    w1, b1, w2, b2, w3, b3 = params
    h1 = jnp.maximum(x @ w1.T + b1, 0.0)
    h2 = jnp.maximum(h1 @ w2.T + b2, 0.0)
    return jax.nn.sigmoid(h2 @ w3.T + b3)


if __name__ == "__main__":
    key = jax.random.PRNGKey(0)
    k_params, k_x = jax.random.split(key)

    params = init_params(k_params)
    packed = pack_params(params)

    # batch=8, features=2 (brightness, eye-movement variance)
    x = jax.random.normal(k_x, (8, 2), jnp.float32)

    out = jax.block_until_ready(dual_branch_forward(x, packed))
    ref = reference_forward(x, params)

    assert out.shape == (8, 1)
    # Tolerance loosened to ~1e-3 because the EUP approximate reciprocal
    # (pl.reciprocal(..., approx=True)) carries ~2^-12 relative error.
    assert jnp.allclose(out, ref, atol=1e-3, rtol=1e-3), float(jnp.max(jnp.abs(out - ref)))

    print("KERNEL_OK")
</pallas_src>

<mosaic_0001>
module attributes {stable_mosaic.version = 11 : i64} {
  func.func @kernel(%arg0: i32, %arg1: memref<193xf32, #tpu.memory_space<smem>>, %arg2: memref<2x1x128xf32, #tpu.memory_space<vmem>>, %arg3: memref<1x128xf32, #tpu.memory_space<vmem>>) attributes {dimension_semantics = [#tpu.dimension_semantics<parallel>], iteration_bounds = array<i64: 1>, scalar_prefetch = 0 : i64, scratch_operands = 0 : i64, tpu.core_type = #tpu.core_type<tc>, window_params = [{transform_indices = @transform_0, window_bounds = array<i64: 193>}, {transform_indices = @transform_1, window_bounds = array<i64: 2, 1, 128>}, {transform_indices = @transform_2, window_bounds = array<i64: 1, 128>}]} {
    %c0 = arith.constant 0 : index
    %c0_0 = arith.constant 0 : index
    %c0_1 = arith.constant 0 : index
    %0 = vector.load %arg2[%c0, %c0_0, %c0_1] : memref<2x1x128xf32, #tpu.memory_space<vmem>>, vector<1x1x128xf32>
    %1 = vector.shape_cast %0 : vector<1x1x128xf32> to vector<1x128xf32>
    %c1 = arith.constant 1 : index
    %c0_2 = arith.constant 0 : index
    %c0_3 = arith.constant 0 : index
    %2 = vector.load %arg2[%c1, %c0_2, %c0_3] : memref<2x1x128xf32, #tpu.memory_space<vmem>>, vector<1x1x128xf32>
    %3 = vector.shape_cast %2 : vector<1x1x128xf32> to vector<1x128xf32>
    %c0_4 = arith.constant 0 : index
    %4 = memref.load %arg1[%c0_4] : memref<193xf32, #tpu.memory_space<smem>>
    %5 = vector.broadcast %4 : f32 to vector<1x128xf32>
    %6 = arith.mulf %5, %1 : vector<1x128xf32>
    %c1_5 = arith.constant 1 : index
    %7 = memref.load %arg1[%c1_5] : memref<193xf32, #tpu.memory_space<smem>>
    %8 = vector.broadcast %7 : f32 to vector<1x128xf32>
    %9 = arith.mulf %8, %3 : vector<1x128xf32>
    %10 = arith.addf %6, %9 : vector<1x128xf32>
    %c32 = arith.constant 32 : index
    %11 = memref.load %arg1[%c32] : memref<193xf32, #tpu.memory_space<smem>>
    %12 = vector.broadcast %11 : f32 to vector<1x128xf32>
    %13 = arith.addf %10, %12 : vector<1x128xf32>
    %cst = arith.constant 0.000000e+00 : f32
    %14 = vector.broadcast %cst : f32 to vector<1x128xf32>
    %15 = arith.maximumf %13, %14 : vector<1x128xf32>
    %c2 = arith.constant 2 : index
    %16 = memref.load %arg1[%c2] : memref<193xf32, #tpu.memory_space<smem>>
    %17 = vector.broadcast %16 : f32 to vector<1x128xf32>
    %18 = arith.mulf %17, %1 : vector<1x128xf32>
    %c3 = arith.constant 3 : index
    %19 = memref.load %arg1[%c3] : memref<193xf32, #tpu.memory_space<smem>>
    %20 = vector.broadcast %19 : f32 to vector<1x128xf32>
    %21 = arith.mulf %20, %3 : vector<1x128xf32>
    %22 = arith.addf %18, %21 : vector<1x128xf32>
    %c33 = arith.constant 33 : index
    %23 = memref.load %arg1[%c33] : memref<193xf32, #tpu.memory_space<smem>>
    %24 = vector.broadcast %23 : f32 to vector<1x128xf32>
    %25 = arith.addf %22, %24 : vector<1x128xf32>
    %cst_6 = arith.constant 0.000000e+00 : f32
    %26 = vector.broadcast %cst_6 : f32 to vector<1x128xf32>
    %27 = arith.maximumf %25, %26 : vector<1x128xf32>
    %c4 = arith.constant 4 : index
    %28 = memref.load %arg1[%c4] : memref<193xf32, #tpu.memory_space<smem>>
    %29 = vector.broadcast %28 : f32 to vector<1x128xf32>
    %30 = arith.mulf %29, %1 : vector<1x128xf32>
    %c5 = arith.constant 5 : index
    %31 = memref.load %arg1[%c5] : memref<193xf32, #tpu.memory_space<smem>>
    %32 = vector.broadcast %31 : f32 to vector<1x128xf32>
    %33 = arith.mulf %32, %3 : vector<1x128xf32>
    %34 = arith.addf %30, %33 : vector<1x128xf32>
    %c34 = arith.constant 34 : index
    %35 = memref.load %arg1[%c34] : memref<193xf32, #tpu.memory_space<smem>>
    %36 = vector.broadcast %35 : f32 to vector<1x128xf32>
    %37 = arith.addf %34, %36 : vector<1x128xf32>
    %cst_7 = arith.constant 0.000000e+00 : f32
    %38 = vector.broadcast %cst_7 : f32 to vector<1x128xf32>
    %39 = arith.maximumf %37, %38 : vector<1x128xf32>
    %c6 = arith.constant 6 : index
    %40 = memref.load %arg1[%c6] : memref<193xf32, #tpu.memory_space<smem>>
    %41 = vector.broadcast %40 : f32 to vector<1x128xf32>
    %42 = arith.mulf %41, %1 : vector<1x128xf32>
    %c7 = arith.constant 7 : index
    %43 = memref.load %arg1[%c7] : memref<193xf32, #tpu.memory_space<smem>>
    %44 = vector.broadcast %43 : f32 to vector<1x128xf32>
    %45 = arith.mulf %44, %3 : vector<1x128xf32>
    %46 = arith.addf %42, %45 : vector<1x128xf32>
    %c35 = arith.constant 35 : index
    %47 = memref.load %arg1[%c35] : memref<193xf32, #tpu.memory_space<smem>>
    %48 = vector.broadcast %47 : f32 to vector<1x128xf32>
    %49 = arith.addf %46, %48 : vector<1x128xf32>
    %cst_8 = arith.constant 0.000000e+00 : f32
    %50 = vector.broadcast %cst_8 : f32 to vector<1x128xf32>
    %51 = arith.maximumf %49, %50 : vector<1x128xf32>
    %c8 = arith.constant 8 : index
    %52 = memref.load %arg1[%c8] : memref<193xf32, #tpu.memory_space<smem>>
    %53 = vector.broadcast %52 : f32 to vector<1x128xf32>
    %54 = arith.mulf %53, %1 : vector<1x128xf32>
    %c9 = arith.constant 9 : index
    %55 = memref.load %arg1[%c9] : memref<193xf32, #tpu.memory_space<smem>>
    %56 = vector.broadcast %55 : f32 to vector<1x128xf32>
    %57 = arith.mulf %56, %3 : vector<1x128xf32>
    %58 = arith.addf %54, %57 : vector<1x128xf32>
    %c36 = arith.constant 36 : index
    %59 = memref.load %arg1[%c36] : memref<193xf32, #tpu.memory_space<smem>>
    %60 = vector.broadcast %59 : f32 to vector<1x128xf32>
    %61 = arith.addf %58, %60 : vector<1x128xf32>
    %cst_9 = arith.constant 0.000000e+00 : f32
    %62 = vector.broadcast %cst_9 : f32 to vector<1x128xf32>
    %63 = arith.maximumf %61, %62 : vector<1x128xf32>
    %c10 = arith.constant 10 : index
    %64 = memref.load %arg1[%c10] : memref<193xf32, #tpu.memory_space<smem>>
    %65 = vector.broadcast %64 : f32 to vector<1x128xf32>
    %66 = arith.mulf %65, %1 : vector<1x128xf32>
    %c11 = arith.constant 11 : index
    %67 = memref.load %arg1[%c11] : memref<193xf32, #tpu.memory_space<smem>>
    %68 = vector.broadcast %67 : f32 to vector<1x128xf32>
    %69 = arith.mulf %68, %3 : vector<1x128xf32>
    %70 = arith.addf %66, %69 : vector<1x128xf32>
    %c37 = arith.constant 37 : index
    %71 = memref.load %arg1[%c37] : memref<193xf32, #tpu.memory_space<smem>>
    %72 = vector.broadcast %71 : f32 to vector<1x128xf32>
    %73 = arith.addf %70, %72 : vector<1x128xf32>
    %cst_10 = arith.constant 0.000000e+00 : f32
    %74 = vector.broadcast %cst_10 : f32 to vector<1x128xf32>
    %75 = arith.maximumf %73, %74 : vector<1x128xf32>
    %c12 = arith.constant 12 : index
    %76 = memref.load %arg1[%c12] : memref<193xf32, #tpu.memory_space<smem>>
    %77 = vector.broadcast %76 : f32 to vector<1x128xf32>
    %78 = arith.mulf %77, %1 : vector<1x128xf32>
    %c13 = arith.constant 13 : index
    %79 = memref.load %arg1[%c13] : memref<193xf32, #tpu.memory_space<smem>>
    %80 = vector.broadcast %79 : f32 to vector<1x128xf32>
    %81 = arith.mulf %80, %3 : vector<1x128xf32>
    %82 = arith.addf %78, %81 : vector<1x128xf32>
    %c38 = arith.constant 38 : index
    %83 = memref.load %arg1[%c38] : memref<193xf32, #tpu.memory_space<smem>>
    %84 = vector.broadcast %83 : f32 to vector<1x128xf32>
    %85 = arith.addf %82, %84 : vector<1x128xf32>
    %cst_11 = arith.constant 0.000000e+00 : f32
    %86 = vector.broadcast %cst_11 : f32 to vector<1x128xf32>
    %87 = arith.maximumf %85, %86 : vector<1x128xf32>
    %c14 = arith.constant 14 : index
    %88 = memref.load %arg1[%c14] : memref<193xf32, #tpu.memory_space<smem>>
    %89 = vector.broadcast %88 : f32 to vector<1x128xf32>
    %90 = arith.mulf %89, %1 : vector<1x128xf32>
    %c15 = arith.constant 15 : index
    %91 = memref.load %arg1[%c15] : memref<193xf32, #tpu.memory_space<smem>>
    %92 = vector.broadcast %91 : f32 to vector<1x128xf32>
    %93 = arith.mulf %92, %3 : vector<1x128xf32>
    %94 = arith.addf %90, %93 : vector<1x128xf32>
    %c39 = arith.constant 39 : index
    %95 = memref.load %arg1[%c39] : memref<193xf32, #tpu.memory_space<smem>>
    %96 = vector.broadcast %95 : f32 to vector<1x128xf32>
    %97 = arith.addf %94, %96 : vector<1x128xf32>
    %cst_12 = arith.constant 0.000000e+00 : f32
    %98 = vector.broadcast %cst_12 : f32 to vector<1x128xf32>
    %99 = arith.maximumf %97, %98 : vector<1x128xf32>
    %c16 = arith.constant 16 : index
    %100 = memref.load %arg1[%c16] : memref<193xf32, #tpu.memory_space<smem>>
    %101 = vector.broadcast %100 : f32 to vector<1x128xf32>
    %102 = arith.mulf %101, %1 : vector<1x128xf32>
    %c17 = arith.constant 17 : index
    %103 = memref.load %arg1[%c17] : memref<193xf32, #tpu.memory_space<smem>>
    %104 = vector.broadcast %103 : f32 to vector<1x128xf32>
    %105 = arith.mulf %104, %3 : vector<1x128xf32>
    %106 = arith.addf %102, %105 : vector<1x128xf32>
    %c40 = arith.constant 40 : index
    %107 = memref.load %arg1[%c40] : memref<193xf32, #tpu.memory_space<smem>>
    %108 = vector.broadcast %107 : f32 to vector<1x128xf32>
    %109 = arith.addf %106, %108 : vector<1x128xf32>
    %cst_13 = arith.constant 0.000000e+00 : f32
    %110 = vector.broadcast %cst_13 : f32 to vector<1x128xf32>
    %111 = arith.maximumf %109, %110 : vector<1x128xf32>
    %c18 = arith.constant 18 : index
    %112 = memref.load %arg1[%c18] : memref<193xf32, #tpu.memory_space<smem>>
    %113 = vector.broadcast %112 : f32 to vector<1x128xf32>
    %114 = arith.mulf %113, %1 : vector<1x128xf32>
    %c19 = arith.constant 19 : index
    %115 = memref.load %arg1[%c19] : memref<193xf32, #tpu.memory_space<smem>>
    %116 = vector.broadcast %115 : f32 to vector<1x128xf32>
    %117 = arith.mulf %116, %3 : vector<1x128xf32>
    %118 = arith.addf %114, %117 : vector<1x128xf32>
    %c41 = arith.constant 41 : index
    %119 = memref.load %arg1[%c41] : memref<193xf32, #tpu.memory_space<smem>>
    %120 = vector.broadcast %119 : f32 to vector<1x128xf32>
    %121 = arith.addf %118, %120 : vector<1x128xf32>
    %cst_14 = arith.constant 0.000000e+00 : f32
    %122 = vector.broadcast %cst_14 : f32 to vector<1x128xf32>
    %123 = arith.maximumf %121, %122 : vector<1x128xf32>
    %c20 = arith.constant 20 : index
    %124 = memref.load %arg1[%c20] : memref<193xf32, #tpu.memory_space<smem>>
    %125 = vector.broadcast %124 : f32 to vector<1x128xf32>
    %126 = arith.mulf %125, %1 : vector<1x128xf32>
    %c21 = arith.constant 21 : index
    %127 = memref.load %arg1[%c21] : memref<193xf32, #tpu.memory_space<smem>>
    %128 = vector.broadcast %127 : f32 to vector<1x128xf32>
    %129 = arith.mulf %128, %3 : vector<1x128xf32>
    %130 = arith.addf %126, %129 : vector<1x128xf32>
    %c42 = arith.constant 42 : index
    %131 = memref.load %arg1[%c42] : memref<193xf32, #tpu.memory_space<smem>>
    %132 = vector.broadcast %131 : f32 to vector<1x128xf32>
    %133 = arith.addf %130, %132 : vector<1x128xf32>
    %cst_15 = arith.constant 0.000000e+00 : f32
    %134 = vector.broadcast %cst_15 : f32 to vector<1x128xf32>
    %135 = arith.maximumf %133, %134 : vector<1x128xf32>
    %c22 = arith.constant 22 : index
    %136 = memref.load %arg1[%c22] : memref<193xf32, #tpu.memory_space<smem>>
    %137 = vector.broadcast %136 : f32 to vector<1x128xf32>
    %138 = arith.mulf %137, %1 : vector<1x128xf32>
    %c23 = arith.constant 23 : index
    %139 = memref.load %arg1[%c23] : memref<193xf32, #tpu.memory_space<smem>>
    %140 = vector.broadcast %139 : f32 to vector<1x128xf32>
    %141 = arith.mulf %140, %3 : vector<1x128xf32>
    %142 = arith.addf %138, %141 : vector<1x128xf32>
    %c43 = arith.constant 43 : index
    %143 = memref.load %arg1[%c43] : memref<193xf32, #tpu.memory_space<smem>>
    %144 = vector.broadcast %143 : f32 to vector<1x128xf32>
    %145 = arith.addf %142, %144 : vector<1x128xf32>
    %cst_16 = arith.constant 0.000000e+00 : f32
    %146 = vector.broadcast %cst_16 : f32 to vector<1x128xf32>
    %147 = arith.maximumf %145, %146 : vector<1x128xf32>
    %c24 = arith.constant 24 : index
    %148 = memref.load %arg1[%c24] : memref<193xf32, #tpu.memory_space<smem>>
    %149 = vector.broadcast %148 : f32 to vector<1x128xf32>
    %150 = arith.mulf %149, %1 : vector<1x128xf32>
    %c25 = arith.constant 25 : index
    %151 = memref.load %arg1[%c25] : memref<193xf32, #tpu.memory_space<smem>>
    %152 = vector.broadcast %151 : f32 to vector<1x128xf32>
    %153 = arith.mulf %152, %3 : vector<1x128xf32>
    %154 = arith.addf %150, %153 : vector<1x128xf32>
    %c44 = arith.constant 44 : index
    %155 = memref.load %arg1[%c44] : memref<193xf32, #tpu.memory_space<smem>>
    %156 = vector.broadcast %155 : f32 to vector<1x128xf32>
    %157 = arith.addf %154, %156 : vector<1x128xf32>
    %cst_17 = arith.constant 0.000000e+00 : f32
    %158 = vector.broadcast %cst_17 : f32 to vector<1x128xf32>
    %159 = arith.maximumf %157, %158 : vector<1x128xf32>
    %c26 = arith.constant 26 : index
    %160 = memref.load %arg1[%c26] : memref<193xf32, #tpu.memory_space<smem>>
    %161 = vector.broadcast %160 : f32 to vector<1x128xf32>
    %162 = arith.mulf %161, %1 : vector<1x128xf32>
    %c27 = arith.constant 27 : index
    %163 = memref.load %arg1[%c27] : memref<193xf32, #tpu.memory_space<smem>>
    %164 = vector.broadcast %163 : f32 to vector<1x128xf32>
    %165 = arith.mulf %164, %3 : vector<1x128xf32>
    %166 = arith.addf %162, %165 : vector<1x128xf32>
    %c45 = arith.constant 45 : index
    %167 = memref.load %arg1[%c45] : memref<193xf32, #tpu.memory_space<smem>>
    %168 = vector.broadcast %167 : f32 to vector<1x128xf32>
    %169 = arith.addf %166, %168 : vector<1x128xf32>
    %cst_18 = arith.constant 0.000000e+00 : f32
    %170 = vector.broadcast %cst_18 : f32 to vector<1x128xf32>
    %171 = arith.maximumf %169, %170 : vector<1x128xf32>
    %c28 = arith.constant 28 : index
    %172 = memref.load %arg1[%c28] : memref<193xf32, #tpu.memory_space<smem>>
    %173 = vector.broadcast %172 : f32 to vector<1x128xf32>
    %174 = arith.mulf %173, %1 : vector<1x128xf32>
    %c29 = arith.constant 29 : index
    %175 = memref.load %arg1[%c29] : memref<193xf32, #tpu.memory_space<smem>>
    %176 = vector.broadcast %175 : f32 to vector<1x128xf32>
    %177 = arith.mulf %176, %3 : vector<1x128xf32>
    %178 = arith.addf %174, %177 : vector<1x128xf32>
    %c46 = arith.constant 46 : index
    %179 = memref.load %arg1[%c46] : memref<193xf32, #tpu.memory_space<smem>>
    %180 = vector.broadcast %179 : f32 to vector<1x128xf32>
    %181 = arith.addf %178, %180 : vector<1x128xf32>
    %cst_19 = arith.constant 0.000000e+00 : f32
    %182 = vector.broadcast %cst_19 : f32 to vector<1x128xf32>
    %183 = arith.maximumf %181, %182 : vector<1x128xf32>
    %c30 = arith.constant 30 : index
    %184 = memref.load %arg1[%c30] : memref<193xf32, #tpu.memory_space<smem>>
    %185 = vector.broadcast %184 : f32 to vector<1x128xf32>
    %186 = arith.mulf %185, %1 : vector<1x128xf32>
    %c31 = arith.constant 31 : index
    %187 = memref.load %arg1[%c31] : memref<193xf32, #tpu.memory_space<smem>>
    %188 = vector.broadcast %187 : f32 to vector<1x128xf32>
    %189 = arith.mulf %188, %3 : vector<1x128xf32>
    %190 = arith.addf %186, %189 : vector<1x128xf32>
    %c47 = arith.constant 47 : index
    %191 = memref.load %arg1[%c47] : memref<193xf32, #tpu.memory_space<smem>>
    %192 = vector.broadcast %191 : f32 to vector<1x128xf32>
    %193 = arith.addf %190, %192 : vector<1x128xf32>
    %cst_20 = arith.constant 0.000000e+00 : f32
    %194 = vector.broadcast %cst_20 : f32 to vector<1x128xf32>
    %195 = arith.maximumf %193, %194 : vector<1x128xf32>
    %c48 = arith.constant 48 : index
    %196 = memref.load %arg1[%c48] : memref<193xf32, #tpu.memory_space<smem>>
    %197 = vector.broadcast %196 : f32 to vector<1x128xf32>
    %198 = arith.mulf %197, %15 : vector<1x128xf32>
    %c49 = arith.constant 49 : index
    %199 = memref.load %arg1[%c49] : memref<193xf32, #tpu.memory_space<smem>>
    %200 = vector.broadcast %199 : f32 to vector<1x128xf32>
    %201 = arith.mulf %200, %27 : vector<1x128xf32>
    %202 = arith.addf %198, %201 : vector<1x128xf32>
    %c50 = arith.constant 50 : index
    %203 = memref.load %arg1[%c50] : memref<193xf32, #tpu.memory_space<smem>>
    %204 = vector.broadcast %203 : f32 to vector<1x128xf32>
    %205 = arith.mulf %204, %39 : vector<1x128xf32>
    %206 = arith.addf %202, %205 : vector<1x128xf32>
    %c51 = arith.constant 51 : index
    %207 = memref.load %arg1[%c51] : memref<193xf32, #tpu.memory_space<smem>>
    %208 = vector.broadcast %207 : f32 to vector<1x128xf32>
    %209 = arith.mulf %208, %51 : vector<1x128xf32>
    %210 = arith.addf %206, %209 : vector<1x128xf32>
    %c52 = arith.constant 52 : index
    %211 = memref.load %arg1[%c52] : memref<193xf32, #tpu.memory_space<smem>>
    %212 = vector.broadcast %211 : f32 to vector<1x128xf32>
    %213 = arith.mulf %212, %63 : vector<1x128xf32>
    %214 = arith.addf %210, %213 : vector<1x128xf32>
    %c53 = arith.constant 53 : index
    %215 = memref.load %arg1[%c53] : memref<193xf32, #tpu.memory_space<smem>>
    %216 = vector.broadcast %215 : f32 to vector<1x128xf32>
    %217 = arith.mulf %216, %75 : vector<1x128xf32>
    %218 = arith.addf %214, %217 : vector<1x128xf32>
    %c54 = arith.constant 54 : index
    %219 = memref.load %arg1[%c54] : memref<193xf32, #tpu.memory_space<smem>>
    %220 = vector.broadcast %219 : f32 to vector<1x128xf32>
    %221 = arith.mulf %220, %87 : vector<1x128xf32>
    %222 = arith.addf %218, %221 : vector<1x128xf32>
    %c55 = arith.constant 55 : index
    %223 = memref.load %arg1[%c55] : memref<193xf32, #tpu.memory_space<smem>>
    %224 = vector.broadcast %223 : f32 to vector<1x128xf32>
    %225 = arith.mulf %224, %99 : vector<1x128xf32>
    %226 = arith.addf %222, %225 : vector<1x128xf32>
    %c56 = arith.constant 56 : index
    %227 = memref.load %arg1[%c56] : memref<193xf32, #tpu.memory_space<smem>>
    %228 = vector.broadcast %227 : f32 to vector<1x128xf32>
    %229 = arith.mulf %228, %111 : vector<1x128xf32>
    %230 = arith.addf %226, %229 : vector<1x128xf32>
    %c57 = arith.constant 57 : index
    %231 = memref.load %arg1[%c57] : memref<193xf32, #tpu.memory_space<smem>>
    %232 = vector.broadcast %231 : f32 to vector<1x128xf32>
    %233 = arith.mulf %232, %123 : vector<1x128xf32>
    %234 = arith.addf %230, %233 : vector<1x128xf32>
    %c58 = arith.constant 58 : index
    %235 = memref.load %arg1[%c58] : memref<193xf32, #tpu.memory_space<smem>>
    %236 = vector.broadcast %235 : f32 to vector<1x128xf32>
    %237 = arith.mulf %236, %135 : vector<1x128xf32>
    %238 = arith.addf %234, %237 : vector<1x128xf32>
    %c59 = arith.constant 59 : index
    %239 = memref.load %arg1[%c59] : memref<193xf32, #tpu.memory_space<smem>>
    %240 = vector.broadcast %239 : f32 to vector<1x128xf32>
    %241 = arith.mulf %240, %147 : vector<1x128xf32>
    %242 = arith.addf %238, %241 : vector<1x128xf32>
    %c60 = arith.constant 60 : index
    %243 = memref.load %arg1[%c60] : memref<193xf32, #tpu.memory_space<smem>>
    %244 = vector.broadcast %243 : f32 to vector<1x128xf32>
    %245 = arith.mulf %244, %159 : vector<1x128xf32>
    %246 = arith.addf %242, %245 : vector<1x128xf32>
    %c61 = arith.constant 61 : index
    %247 = memref.load %arg1[%c61] : memref<193xf32, #tpu.memory_space<smem>>
    %248 = vector.broadcast %247 : f32 to vector<1x128xf32>
    %249 = arith.mulf %248, %171 : vector<1x128xf32>
    %250 = arith.addf %246, %249 : vector<1x128xf32>
    %c62 = arith.constant 62 : index
    %251 = memref.load %arg1[%c62] : memref<193xf32, #tpu.memory_space<smem>>
    %252 = vector.broadcast %251 : f32 to vector<1x128xf32>
    %253 = arith.mulf %252, %183 : vector<1x128xf32>
    %254 = arith.addf %250, %253 : vector<1x128xf32>
    %c63 = arith.constant 63 : index
    %255 = memref.load %arg1[%c63] : memref<193xf32, #tpu.memory_space<smem>>
    %256 = vector.broadcast %255 : f32 to vector<1x128xf32>
    %257 = arith.mulf %256, %195 : vector<1x128xf32>
    %258 = arith.addf %254, %257 : vector<1x128xf32>
    %c176 = arith.constant 176 : index
    %259 = memref.load %arg1[%c176] : memref<193xf32, #tpu.memory_space<smem>>
    %260 = vector.broadcast %259 : f32 to vector<1x128xf32>
    %261 = arith.addf %258, %260 : vector<1x128xf32>
    %cst_21 = arith.constant 0.000000e+00 : f32
    %262 = vector.broadcast %cst_21 : f32 to vector<1x128xf32>
    %263 = arith.maximumf %261, %262 : vector<1x128xf32>
    %c64 = arith.constant 64 : index
    %264 = memref.load %arg1[%c64] : memref<193xf32, #tpu.memory_space<smem>>
    %265 = vector.broadcast %264 : f32 to vector<1x128xf32>
    %266 = arith.mulf %265, %15 : vector<1x128xf32>
    %c65 = arith.constant 65 : index
    %267 = memref.load %arg1[%c65] : memref<193xf32, #tpu.memory_space<smem>>
    %268 = vector.broadcast %267 : f32 to vector<1x128xf32>
    %269 = arith.mulf %268, %27 : vector<1x128xf32>
    %270 = arith.addf %266, %269 : vector<1x128xf32>
    %c66 = arith.constant 66 : index
    %271 = memref.load %arg1[%c66] : memref<193xf32, #tpu.memory_space<smem>>
    %272 = vector.broadcast %271 : f32 to vector<1x128xf32>
    %273 = arith.mulf %272, %39 : vector<1x128xf32>
    %274 = arith.addf %270, %273 : vector<1x128xf32>
    %c67 = arith.constant 67 : index
    %275 = memref.load %arg1[%c67] : memref<193xf32, #tpu.memory_space<smem>>
    %276 = vector.broadcast %275 : f32 to vector<1x128xf32>
    %277 = arith.mulf %276, %51 : vector<1x128xf32>
    %278 = arith.addf %274, %277 : vector<1x128xf32>
    %c68 = arith.constant 68 : index
    %279 = memref.load %arg1[%c68] : memref<193xf32, #tpu.memory_space<smem>>
    %280 = vector.broadcast %279 : f32 to vector<1x128xf32>
    %281 = arith.mulf %280, %63 : vector<1x128xf32>
    %282 = arith.addf %278, %281 : vector<1x128xf32>
    %c69 = arith.constant 69 : index
    %283 = memref.load %arg1[%c69] : memref<193xf32, #tpu.memory_space<smem>>
    %284 = vector.broadcast %283 : f32 to vector<1x128xf32>
    %285 = arith.mulf %284, %75 : vector<1x128xf32>
    %286 = arith.addf %282, %285 : vector<1x128xf32>
    %c70 = arith.constant 70 : index
    %287 = memref.load %arg1[%c70] : memref<193xf32, #tpu.memory_space<smem>>
    %288 = vector.broadcast %287 : f32 to vector<1x128xf32>
    %289 = arith.mulf %288, %87 : vector<1x128xf32>
    %290 = arith.addf %286, %289 : vector<1x128xf32>
    %c71 = arith.constant 71 : index
    %291 = memref.load %arg1[%c71] : memref<193xf32, #tpu.memory_space<smem>>
    %292 = vector.broadcast %291 : f32 to vector<1x128xf32>
    %293 = arith.mulf %292, %99 : vector<1x128xf32>
    %294 = arith.addf %290, %293 : vector<1x128xf32>
    %c72 = arith.constant 72 : index
    %295 = memref.load %arg1[%c72] : memref<193xf32, #tpu.memory_space<smem>>
    %296 = vector.broadcast %295 : f32 to vector<1x128xf32>
    %297 = arith.mulf %296, %111 : vector<1x128xf32>
    %298 = arith.addf %294, %297 : vector<1x128xf32>
    %c73 = arith.constant 73 : index
    %299 = memref.load %arg1[%c73] : memref<193xf32, #tpu.memory_space<smem>>
    %300 = vector.broadcast %299 : f32 to vector<1x128xf32>
    %301 = arith.mulf %300, %123 : vector<1x128xf32>
    %302 = arith.addf %298, %301 : vector<1x128xf32>
    %c74 = arith.constant 74 : index
    %303 = memref.load %arg1[%c74] : memref<193xf32, #tpu.memory_space<smem>>
    %304 = vector.broadcast %303 : f32 to vector<1x128xf32>
    %305 = arith.mulf %304, %135 : vector<1x128xf32>
    %306 = arith.addf %302, %305 : vector<1x128xf32>
    %c75 = arith.constant 75 : index
    %307 = memref.load %arg1[%c75] : memref<193xf32, #tpu.memory_space<smem>>
    %308 = vector.broadcast %307 : f32 to vector<1x128xf32>
    %309 = arith.mulf %308, %147 : vector<1x128xf32>
    %310 = arith.addf %306, %309 : vector<1x128xf32>
    %c76 = arith.constant 76 : index
    %311 = memref.load %arg1[%c76] : memref<193xf32, #tpu.memory_space<smem>>
    %312 = vector.broadcast %311 : f32 to vector<1x128xf32>
    %313 = arith.mulf %312, %159 : vector<1x128xf32>
    %314 = arith.addf %310, %313 : vector<1x128xf32>
    %c77 = arith.constant 77 : index
    %315 = memref.load %arg1[%c77] : memref<193xf32, #tpu.memory_space<smem>>
    %316 = vector.broadcast %315 : f32 to vector<1x128xf32>
    %317 = arith.mulf %316, %171 : vector<1x128xf32>
    %318 = arith.addf %314, %317 : vector<1x128xf32>
    %c78 = arith.constant 78 : index
    %319 = memref.load %arg1[%c78] : memref<193xf32, #tpu.memory_space<smem>>
    %320 = vector.broadcast %319 : f32 to vector<1x128xf32>
    %321 = arith.mulf %320, %183 : vector<1x128xf32>
    %322 = arith.addf %318, %321 : vector<1x128xf32>
    %c79 = arith.constant 79 : index
    %323 = memref.load %arg1[%c79] : memref<193xf32, #tpu.memory_space<smem>>
    %324 = vector.broadcast %323 : f32 to vector<1x128xf32>
    %325 = arith.mulf %324, %195 : vector<1x128xf32>
    %326 = arith.addf %322, %325 : vector<1x128xf32>
    %c177 = arith.constant 177 : index
    %327 = memref.load %arg1[%c177] : memref<193xf32, #tpu.memory_space<smem>>
    %328 = vector.broadcast %327 : f32 to vector<1x128xf32>
    %329 = arith.addf %326, %328 : vector<1x128xf32>
    %cst_22 = arith.constant 0.000000e+00 : f32
    %330 = vector.broadcast %cst_22 : f32 to vector<1x128xf32>
    %331 = arith.maximumf %329, %330 : vector<1x128xf32>
    %c80 = arith.constant 80 : index
    %332 = memref.load %arg1[%c80] : memref<193xf32, #tpu.memory_space<smem>>
    %333 = vector.broadcast %332 : f32 to vector<1x128xf32>
    %334 = arith.mulf %333, %15 : vector<1x128xf32>
    %c81 = arith.constant 81 : index
    %335 = memref.load %arg1[%c81] : memref<193xf32, #tpu.memory_space<smem>>
    %336 = vector.broadcast %335 : f32 to vector<1x128xf32>
    %337 = arith.mulf %336, %27 : vector<1x128xf32>
    %338 = arith.addf %334, %337 : vector<1x128xf32>
    %c82 = arith.constant 82 : index
    %339 = memref.load %arg1[%c82] : memref<193xf32, #tpu.memory_space<smem>>
    %340 = vector.broadcast %339 : f32 to vector<1x128xf32>
    %341 = arith.mulf %340, %39 : vector<1x128xf32>
    %342 = arith.addf %338, %341 : vector<1x128xf32>
    %c83 = arith.constant 83 : index
    %343 = memref.load %arg1[%c83] : memref<193xf32, #tpu.memory_space<smem>>
    %344 = vector.broadcast %343 : f32 to vector<1x128xf32>
    %345 = arith.mulf %344, %51 : vector<1x128xf32>
    %346 = arith.addf %342, %345 : vector<1x128xf32>
    %c84 = arith.constant 84 : index
    %347 = memref.load %arg1[%c84] : memref<193xf32, #tpu.memory_space<smem>>
    %348 = vector.broadcast %347 : f32 to vector<1x128xf32>
    %349 = arith.mulf %348, %63 : vector<1x128xf32>
    %350 = arith.addf %346, %349 : vector<1x128xf32>
    %c85 = arith.constant 85 : index
    %351 = memref.load %arg1[%c85] : memref<193xf32, #tpu.memory_space<smem>>
    %352 = vector.broadcast %351 : f32 to vector<1x128xf32>
    %353 = arith.mulf %352, %75 : vector<1x128xf32>
    %354 = arith.addf %350, %353 : vector<1x128xf32>
    %c86 = arith.constant 86 : index
    %355 = memref.load %arg1[%c86] : memref<193xf32, #tpu.memory_space<smem>>
    %356 = vector.broadcast %355 : f32 to vector<1x128xf32>
    %357 = arith.mulf %356, %87 : vector<1x128xf32>
    %358 = arith.addf %354, %357 : vector<1x128xf32>
    %c87 = arith.constant 87 : index
    %359 = memref.load %arg1[%c87] : memref<193xf32, #tpu.memory_space<smem>>
    %360 = vector.broadcast %359 : f32 to vector<1x128xf32>
    %361 = arith.mulf %360, %99 : vector<1x128xf32>
    %362 = arith.addf %358, %361 : vector<1x128xf32>
    %c88 = arith.constant 88 : index
    %363 = memref.load %arg1[%c88] : memref<193xf32, #tpu.memory_space<smem>>
    %364 = vector.broadcast %363 : f32 to vector<1x128xf32>
    %365 = arith.mulf %364, %111 : vector<1x128xf32>
    %366 = arith.addf %362, %365 : vector<1x128xf32>
    %c89 = arith.constant 89 : index
    %367 = memref.load %arg1[%c89] : memref<193xf32, #tpu.memory_space<smem>>
    %368 = vector.broadcast %367 : f32 to vector<1x128xf32>
    %369 = arith.mulf %368, %123 : vector<1x128xf32>
    %370 = arith.addf %366, %369 : vector<1x128xf32>
    %c90 = arith.constant 90 : index
    %371 = memref.load %arg1[%c90] : memref<193xf32, #tpu.memory_space<smem>>
    %372 = vector.broadcast %371 : f32 to vector<1x128xf32>
    %373 = arith.mulf %372, %135 : vector<1x128xf32>
    %374 = arith.addf %370, %373 : vector<1x128xf32>
    %c91 = arith.constant 91 : index
    %375 = memref.load %arg1[%c91] : memref<193xf32, #tpu.memory_space<smem>>
    %376 = vector.broadcast %375 : f32 to vector<1x128xf32>
    %377 = arith.mulf %376, %147 : vector<1x128xf32>
    %378 = arith.addf %374, %377 : vector<1x128xf32>
    %c92 = arith.constant 92 : index
    %379 = memref.load %arg1[%c92] : memref<193xf32, #tpu.memory_space<smem>>
    %380 = vector.broadcast %379 : f32 to vector<1x128xf32>
    %381 = arith.mulf %380, %159 : vector<1x128xf32>
    %382 = arith.addf %378, %381 : vector<1x128xf32>
    %c93 = arith.constant 93 : index
    %383 = memref.load %arg1[%c93] : memref<193xf32, #tpu.memory_space<smem>>
    %384 = vector.broadcast %383 : f32 to vector<1x128xf32>
    %385 = arith.mulf %384, %171 : vector<1x128xf32>
    %386 = arith.addf %382, %385 : vector<1x128xf32>
    %c94 = arith.constant 94 : index
    %387 = memref.load %arg1[%c94] : memref<193xf32, #tpu.memory_space<smem>>
    %388 = vector.broadcast %387 : f32 to vector<1x128xf32>
    %389 = arith.mulf %388, %183 : vector<1x128xf32>
    %390 = arith.addf %386, %389 : vector<1x128xf32>
    %c95 = arith.constant 95 : index
    %391 = memref.load %arg1[%c95] : memref<193xf32, #tpu.memory_space<smem>>
    %392 = vector.broadcast %391 : f32 to vector<1x128xf32>
    %393 = arith.mulf %392, %195 : vector<1x128xf32>
    %394 = arith.addf %390, %393 : vector<1x128xf32>
    %c178 = arith.constant 178 : index
    %395 = memref.load %arg1[%c178] : memref<193xf32, #tpu.memory_space<smem>>
    %396 = vector.broadcast %395 : f32 to vector<1x128xf32>
    %397 = arith.addf %394, %396 : vector<1x128xf32>
    %cst_23 = arith.constant 0.000000e+00 : f32
    %398 = vector.broadcast %cst_23 : f32 to vector<1x128xf32>
    %399 = arith.maximumf %397, %398 : vector<1x128xf32>
    %c96 = arith.constant 96 : index
    %400 = memref.load %arg1[%c96] : memref<193xf32, #tpu.memory_space<smem>>
    %401 = vector.broadcast %400 : f32 to vector<1x128xf32>
    %402 = arith.mulf %401, %15 : vector<1x128xf32>
    %c97 = arith.constant 97 : index
    %403 = memref.load %arg1[%c97] : memref<193xf32, #tpu.memory_space<smem>>
    %404 = vector.broadcast %403 : f32 to vector<1x128xf32>
    %405 = arith.mulf %404, %27 : vector<1x128xf32>
    %406 = arith.addf %402, %405 : vector<1x128xf32>
    %c98 = arith.constant 98 : index
    %407 = memref.load %arg1[%c98] : memref<193xf32, #tpu.memory_space<smem>>
    %408 = vector.broadcast %407 : f32 to vector<1x128xf32>
    %409 = arith.mulf %408, %39 : vector<1x128xf32>
    %410 = arith.addf %406, %409 : vector<1x128xf32>
    %c99 = arith.constant 99 : index
    %411 = memref.load %arg1[%c99] : memref<193xf32, #tpu.memory_space<smem>>
    %412 = vector.broadcast %411 : f32 to vector<1x128xf32>
    %413 = arith.mulf %412, %51 : vector<1x128xf32>
    %414 = arith.addf %410, %413 : vector<1x128xf32>
    %c100 = arith.constant 100 : index
    %415 = memref.load %arg1[%c100] : memref<193xf32, #tpu.memory_space<smem>>
    %416 = vector.broadcast %415 : f32 to vector<1x128xf32>
    %417 = arith.mulf %416, %63 : vector<1x128xf32>
    %418 = arith.addf %414, %417 : vector<1x128xf32>
    %c101 = arith.constant 101 : index
    %419 = memref.load %arg1[%c101] : memref<193xf32, #tpu.memory_space<smem>>
    %420 = vector.broadcast %419 : f32 to vector<1x128xf32>
    %421 = arith.mulf %420, %75 : vector<1x128xf32>
    %422 = arith.addf %418, %421 : vector<1x128xf32>
    %c102 = arith.constant 102 : index
    %423 = memref.load %arg1[%c102] : memref<193xf32, #tpu.memory_space<smem>>
    %424 = vector.broadcast %423 : f32 to vector<1x128xf32>
    %425 = arith.mulf %424, %87 : vector<1x128xf32>
    %426 = arith.addf %422, %425 : vector<1x128xf32>
    %c103 = arith.constant 103 : index
    %427 = memref.load %arg1[%c103] : memref<193xf32, #tpu.memory_space<smem>>
    %428 = vector.broadcast %427 : f32 to vector<1x128xf32>
    %429 = arith.mulf %428, %99 : vector<1x128xf32>
    %430 = arith.addf %426, %429 : vector<1x128xf32>
    %c104 = arith.constant 104 : index
    %431 = memref.load %arg1[%c104] : memref<193xf32, #tpu.memory_space<smem>>
    %432 = vector.broadcast %431 : f32 to vector<1x128xf32>
    %433 = arith.mulf %432, %111 : vector<1x128xf32>
    %434 = arith.addf %430, %433 : vector<1x128xf32>
    %c105 = arith.constant 105 : index
    %435 = memref.load %arg1[%c105] : memref<193xf32, #tpu.memory_space<smem>>
    %436 = vector.broadcast %435 : f32 to vector<1x128xf32>
    %437 = arith.mulf %436, %123 : vector<1x128xf32>
    %438 = arith.addf %434, %437 : vector<1x128xf32>
    %c106 = arith.constant 106 : index
    %439 = memref.load %arg1[%c106] : memref<193xf32, #tpu.memory_space<smem>>
    %440 = vector.broadcast %439 : f32 to vector<1x128xf32>
    %441 = arith.mulf %440, %135 : vector<1x128xf32>
    %442 = arith.addf %438, %441 : vector<1x128xf32>
    %c107 = arith.constant 107 : index
    %443 = memref.load %arg1[%c107] : memref<193xf32, #tpu.memory_space<smem>>
    %444 = vector.broadcast %443 : f32 to vector<1x128xf32>
    %445 = arith.mulf %444, %147 : vector<1x128xf32>
    %446 = arith.addf %442, %445 : vector<1x128xf32>
    %c108 = arith.constant 108 : index
    %447 = memref.load %arg1[%c108] : memref<193xf32, #tpu.memory_space<smem>>
    %448 = vector.broadcast %447 : f32 to vector<1x128xf32>
    %449 = arith.mulf %448, %159 : vector<1x128xf32>
    %450 = arith.addf %446, %449 : vector<1x128xf32>
    %c109 = arith.constant 109 : index
    %451 = memref.load %arg1[%c109] : memref<193xf32, #tpu.memory_space<smem>>
    %452 = vector.broadcast %451 : f32 to vector<1x128xf32>
    %453 = arith.mulf %452, %171 : vector<1x128xf32>
    %454 = arith.addf %450, %453 : vector<1x128xf32>
    %c110 = arith.constant 110 : index
    %455 = memref.load %arg1[%c110] : memref<193xf32, #tpu.memory_space<smem>>
    %456 = vector.broadcast %455 : f32 to vector<1x128xf32>
    %457 = arith.mulf %456, %183 : vector<1x128xf32>
    %458 = arith.addf %454, %457 : vector<1x128xf32>
    %c111 = arith.constant 111 : index
    %459 = memref.load %arg1[%c111] : memref<193xf32, #tpu.memory_space<smem>>
    %460 = vector.broadcast %459 : f32 to vector<1x128xf32>
    %461 = arith.mulf %460, %195 : vector<1x128xf32>
    %462 = arith.addf %458, %461 : vector<1x128xf32>
    %c179 = arith.constant 179 : index
    %463 = memref.load %arg1[%c179] : memref<193xf32, #tpu.memory_space<smem>>
    %464 = vector.broadcast %463 : f32 to vector<1x128xf32>
    %465 = arith.addf %462, %464 : vector<1x128xf32>
    %cst_24 = arith.constant 0.000000e+00 : f32
    %466 = vector.broadcast %cst_24 : f32 to vector<1x128xf32>
    %467 = arith.maximumf %465, %466 : vector<1x128xf32>
    %c112 = arith.constant 112 : index
    %468 = memref.load %arg1[%c112] : memref<193xf32, #tpu.memory_space<smem>>
    %469 = vector.broadcast %468 : f32 to vector<1x128xf32>
    %470 = arith.mulf %469, %15 : vector<1x128xf32>
    %c113 = arith.constant 113 : index
    %471 = memref.load %arg1[%c113] : memref<193xf32, #tpu.memory_space<smem>>
    %472 = vector.broadcast %471 : f32 to vector<1x128xf32>
    %473 = arith.mulf %472, %27 : vector<1x128xf32>
    %474 = arith.addf %470, %473 : vector<1x128xf32>
    %c114 = arith.constant 114 : index
    %475 = memref.load %arg1[%c114] : memref<193xf32, #tpu.memory_space<smem>>
    %476 = vector.broadcast %475 : f32 to vector<1x128xf32>
    %477 = arith.mulf %476, %39 : vector<1x128xf32>
    %478 = arith.addf %474, %477 : vector<1x128xf32>
    %c115 = arith.constant 115 : index
    %479 = memref.load %arg1[%c115] : memref<193xf32, #tpu.memory_space<smem>>
    %480 = vector.broadcast %479 : f32 to vector<1x128xf32>
    %481 = arith.mulf %480, %51 : vector<1x128xf32>
    %482 = arith.addf %478, %481 : vector<1x128xf32>
    %c116 = arith.constant 116 : index
    %483 = memref.load %arg1[%c116] : memref<193xf32, #tpu.memory_space<smem>>
    %484 = vector.broadcast %483 : f32 to vector<1x128xf32>
    %485 = arith.mulf %484, %63 : vector<1x128xf32>
    %486 = arith.addf %482, %485 : vector<1x128xf32>
    %c117 = arith.constant 117 : index
    %487 = memref.load %arg1[%c117] : memref<193xf32, #tpu.memory_space<smem>>
    %488 = vector.broadcast %487 : f32 to vector<1x128xf32>
    %489 = arith.mulf %488, %75 : vector<1x128xf32>
    %490 = arith.addf %486, %489 : vector<1x128xf32>
    %c118 = arith.constant 118 : index
    %491 = memref.load %arg1[%c118] : memref<193xf32, #tpu.memory_space<smem>>
    %492 = vector.broadcast %491 : f32 to vector<1x128xf32>
    %493 = arith.mulf %492, %87 : vector<1x128xf32>
    %494 = arith.addf %490, %493 : vector<1x128xf32>
    %c119 = arith.constant 119 : index
    %495 = memref.load %arg1[%c119] : memref<193xf32, #tpu.memory_space<smem>>
    %496 = vector.broadcast %495 : f32 to vector<1x128xf32>
    %497 = arith.mulf %496, %99 : vector<1x128xf32>
    %498 = arith.addf %494, %497 : vector<1x128xf32>
    %c120 = arith.constant 120 : index
    %499 = memref.load %arg1[%c120] : memref<193xf32, #tpu.memory_space<smem>>
    %500 = vector.broadcast %499 : f32 to vector<1x128xf32>
    %501 = arith.mulf %500, %111 : vector<1x128xf32>
    %502 = arith.addf %498, %501 : vector<1x128xf32>
    %c121 = arith.constant 121 : index
    %503 = memref.load %arg1[%c121] : memref<193xf32, #tpu.memory_space<smem>>
    %504 = vector.broadcast %503 : f32 to vector<1x128xf32>
    %505 = arith.mulf %504, %123 : vector<1x128xf32>
    %506 = arith.addf %502, %505 : vector<1x128xf32>
    %c122 = arith.constant 122 : index
    %507 = memref.load %arg1[%c122] : memref<193xf32, #tpu.memory_space<smem>>
    %508 = vector.broadcast %507 : f32 to vector<1x128xf32>
    %509 = arith.mulf %508, %135 : vector<1x128xf32>
    %510 = arith.addf %506, %509 : vector<1x128xf32>
    %c123 = arith.constant 123 : index
    %511 = memref.load %arg1[%c123] : memref<193xf32, #tpu.memory_space<smem>>
    %512 = vector.broadcast %511 : f32 to vector<1x128xf32>
    %513 = arith.mulf %512, %147 : vector<1x128xf32>
    %514 = arith.addf %510, %513 : vector<1x128xf32>
    %c124 = arith.constant 124 : index
    %515 = memref.load %arg1[%c124] : memref<193xf32, #tpu.memory_space<smem>>
    %516 = vector.broadcast %515 : f32 to vector<1x128xf32>
    %517 = arith.mulf %516, %159 : vector<1x128xf32>
    %518 = arith.addf %514, %517 : vector<1x128xf32>
    %c125 = arith.constant 125 : index
    %519 = memref.load %arg1[%c125] : memref<193xf32, #tpu.memory_space<smem>>
    %520 = vector.broadcast %519 : f32 to vector<1x128xf32>
    %521 = arith.mulf %520, %171 : vector<1x128xf32>
    %522 = arith.addf %518, %521 : vector<1x128xf32>
    %c126 = arith.constant 126 : index
    %523 = memref.load %arg1[%c126] : memref<193xf32, #tpu.memory_space<smem>>
    %524 = vector.broadcast %523 : f32 to vector<1x128xf32>
    %525 = arith.mulf %524, %183 : vector<1x128xf32>
    %526 = arith.addf %522, %525 : vector<1x128xf32>
    %c127 = arith.constant 127 : index
    %527 = memref.load %arg1[%c127] : memref<193xf32, #tpu.memory_space<smem>>
    %528 = vector.broadcast %527 : f32 to vector<1x128xf32>
    %529 = arith.mulf %528, %195 : vector<1x128xf32>
    %530 = arith.addf %526, %529 : vector<1x128xf32>
    %c180 = arith.constant 180 : index
    %531 = memref.load %arg1[%c180] : memref<193xf32, #tpu.memory_space<smem>>
    %532 = vector.broadcast %531 : f32 to vector<1x128xf32>
    %533 = arith.addf %530, %532 : vector<1x128xf32>
    %cst_25 = arith.constant 0.000000e+00 : f32
    %534 = vector.broadcast %cst_25 : f32 to vector<1x128xf32>
    %535 = arith.maximumf %533, %534 : vector<1x128xf32>
    %c128 = arith.constant 128 : index
    %536 = memref.load %arg1[%c128] : memref<193xf32, #tpu.memory_space<smem>>
    %537 = vector.broadcast %536 : f32 to vector<1x128xf32>
    %538 = arith.mulf %537, %15 : vector<1x128xf32>
    %c129 = arith.constant 129 : index
    %539 = memref.load %arg1[%c129] : memref<193xf32, #tpu.memory_space<smem>>
    %540 = vector.broadcast %539 : f32 to vector<1x128xf32>
    %541 = arith.mulf %540, %27 : vector<1x128xf32>
    %542 = arith.addf %538, %541 : vector<1x128xf32>
    %c130 = arith.constant 130 : index
    %543 = memref.load %arg1[%c130] : memref<193xf32, #tpu.memory_space<smem>>
    %544 = vector.broadcast %543 : f32 to vector<1x128xf32>
    %545 = arith.mulf %544, %39 : vector<1x128xf32>
    %546 = arith.addf %542, %545 : vector<1x128xf32>
    %c131 = arith.constant 131 : index
    %547 = memref.load %arg1[%c131] : memref<193xf32, #tpu.memory_space<smem>>
    %548 = vector.broadcast %547 : f32 to vector<1x128xf32>
    %549 = arith.mulf %548, %51 : vector<1x128xf32>
    %550 = arith.addf %546, %549 : vector<1x128xf32>
    %c132 = arith.constant 132 : index
    %551 = memref.load %arg1[%c132] : memref<193xf32, #tpu.memory_space<smem>>
    %552 = vector.broadcast %551 : f32 to vector<1x128xf32>
    %553 = arith.mulf %552, %63 : vector<1x128xf32>
    %554 = arith.addf %550, %553 : vector<1x128xf32>
    %c133 = arith.constant 133 : index
    %555 = memref.load %arg1[%c133] : memref<193xf32, #tpu.memory_space<smem>>
    %556 = vector.broadcast %555 : f32 to vector<1x128xf32>
    %557 = arith.mulf %556, %75 : vector<1x128xf32>
    %558 = arith.addf %554, %557 : vector<1x128xf32>
    %c134 = arith.constant 134 : index
    %559 = memref.load %arg1[%c134] : memref<193xf32, #tpu.memory_space<smem>>
    %560 = vector.broadcast %559 : f32 to vector<1x128xf32>
    %561 = arith.mulf %560, %87 : vector<1x128xf32>
    %562 = arith.addf %558, %561 : vector<1x128xf32>
    %c135 = arith.constant 135 : index
    %563 = memref.load %arg1[%c135] : memref<193xf32, #tpu.memory_space<smem>>
    %564 = vector.broadcast %563 : f32 to vector<1x128xf32>
    %565 = arith.mulf %564, %99 : vector<1x128xf32>
    %566 = arith.addf %562, %565 : vector<1x128xf32>
    %c136 = arith.constant 136 : index
    %567 = memref.load %arg1[%c136] : memref<193xf32, #tpu.memory_space<smem>>
    %568 = vector.broadcast %567 : f32 to vector<1x128xf32>
    %569 = arith.mulf %568, %111 : vector<1x128xf32>
    %570 = arith.addf %566, %569 : vector<1x128xf32>
    %c137 = arith.constant 137 : index
    %571 = memref.load %arg1[%c137] : memref<193xf32, #tpu.memory_space<smem>>
    %572 = vector.broadcast %571 : f32 to vector<1x128xf32>
    %573 = arith.mulf %572, %123 : vector<1x128xf32>
    %574 = arith.addf %570, %573 : vector<1x128xf32>
    %c138 = arith.constant 138 : index
    %575 = memref.load %arg1[%c138] : memref<193xf32, #tpu.memory_space<smem>>
    %576 = vector.broadcast %575 : f32 to vector<1x128xf32>
    %577 = arith.mulf %576, %135 : vector<1x128xf32>
    %578 = arith.addf %574, %577 : vector<1x128xf32>
    %c139 = arith.constant 139 : index
    %579 = memref.load %arg1[%c139] : memref<193xf32, #tpu.memory_space<smem>>
    %580 = vector.broadcast %579 : f32 to vector<1x128xf32>
    %581 = arith.mulf %580, %147 : vector<1x128xf32>
    %582 = arith.addf %578, %581 : vector<1x128xf32>
    %c140 = arith.constant 140 : index
    %583 = memref.load %arg1[%c140] : memref<193xf32, #tpu.memory_space<smem>>
    %584 = vector.broadcast %583 : f32 to vector<1x128xf32>
    %585 = arith.mulf %584, %159 : vector<1x128xf32>
    %586 = arith.addf %582, %585 : vector<1x128xf32>
    %c141 = arith.constant 141 : index
    %587 = memref.load %arg1[%c141] : memref<193xf32, #tpu.memory_space<smem>>
    %588 = vector.broadcast %587 : f32 to vector<1x128xf32>
    %589 = arith.mulf %588, %171 : vector<1x128xf32>
    %590 = arith.addf %586, %589 : vector<1x128xf32>
    %c142 = arith.constant 142 : index
    %591 = memref.load %arg1[%c142] : memref<193xf32, #tpu.memory_space<smem>>
    %592 = vector.broadcast %591 : f32 to vector<1x128xf32>
    %593 = arith.mulf %592, %183 : vector<1x128xf32>
    %594 = arith.addf %590, %593 : vector<1x128xf32>
    %c143 = arith.constant 143 : index
    %595 = memref.load %arg1[%c143] : memref<193xf32, #tpu.memory_space<smem>>
    %596 = vector.broadcast %595 : f32 to vector<1x128xf32>
    %597 = arith.mulf %596, %195 : vector<1x128xf32>
    %598 = arith.addf %594, %597 : vector<1x128xf32>
    %c181 = arith.constant 181 : index
    %599 = memref.load %arg1[%c181] : memref<193xf32, #tpu.memory_space<smem>>
    %600 = vector.broadcast %599 : f32 to vector<1x128xf32>
    %601 = arith.addf %598, %600 : vector<1x128xf32>
    %cst_26 = arith.constant 0.000000e+00 : f32
    %602 = vector.broadcast %cst_26 : f32 to vector<1x128xf32>
    %603 = arith.maximumf %601, %602 : vector<1x128xf32>
    %c144 = arith.constant 144 : index
    %604 = memref.load %arg1[%c144] : memref<193xf32, #tpu.memory_space<smem>>
    %605 = vector.broadcast %604 : f32 to vector<1x128xf32>
    %606 = arith.mulf %605, %15 : vector<1x128xf32>
    %c145 = arith.constant 145 : index
    %607 = memref.load %arg1[%c145] : memref<193xf32, #tpu.memory_space<smem>>
    %608 = vector.broadcast %607 : f32 to vector<1x128xf32>
    %609 = arith.mulf %608, %27 : vector<1x128xf32>
    %610 = arith.addf %606, %609 : vector<1x128xf32>
    %c146 = arith.constant 146 : index
    %611 = memref.load %arg1[%c146] : memref<193xf32, #tpu.memory_space<smem>>
    %612 = vector.broadcast %611 : f32 to vector<1x128xf32>
    %613 = arith.mulf %612, %39 : vector<1x128xf32>
    %614 = arith.addf %610, %613 : vector<1x128xf32>
    %c147 = arith.constant 147 : index
    %615 = memref.load %arg1[%c147] : memref<193xf32, #tpu.memory_space<smem>>
    %616 = vector.broadcast %615 : f32 to vector<1x128xf32>
    %617 = arith.mulf %616, %51 : vector<1x128xf32>
    %618 = arith.addf %614, %617 : vector<1x128xf32>
    %c148 = arith.constant 148 : index
    %619 = memref.load %arg1[%c148] : memref<193xf32, #tpu.memory_space<smem>>
    %620 = vector.broadcast %619 : f32 to vector<1x128xf32>
    %621 = arith.mulf %620, %63 : vector<1x128xf32>
    %622 = arith.addf %618, %621 : vector<1x128xf32>
    %c149 = arith.constant 149 : index
    %623 = memref.load %arg1[%c149] : memref<193xf32, #tpu.memory_space<smem>>
    %624 = vector.broadcast %623 : f32 to vector<1x128xf32>
    %625 = arith.mulf %624, %75 : vector<1x128xf32>
    %626 = arith.addf %622, %625 : vector<1x128xf32>
    %c150 = arith.constant 150 : index
    %627 = memref.load %arg1[%c150] : memref<193xf32, #tpu.memory_space<smem>>
    %628 = vector.broadcast %627 : f32 to vector<1x128xf32>
    %629 = arith.mulf %628, %87 : vector<1x128xf32>
    %630 = arith.addf %626, %629 : vector<1x128xf32>
    %c151 = arith.constant 151 : index
    %631 = memref.load %arg1[%c151] : memref<193xf32, #tpu.memory_space<smem>>
    %632 = vector.broadcast %631 : f32 to vector<1x128xf32>
    %633 = arith.mulf %632, %99 : vector<1x128xf32>
    %634 = arith.addf %630, %633 : vector<1x128xf32>
    %c152 = arith.constant 152 : index
    %635 = memref.load %arg1[%c152] : memref<193xf32, #tpu.memory_space<smem>>
    %636 = vector.broadcast %635 : f32 to vector<1x128xf32>
    %637 = arith.mulf %636, %111 : vector<1x128xf32>
    %638 = arith.addf %634, %637 : vector<1x128xf32>
    %c153 = arith.constant 153 : index
    %639 = memref.load %arg1[%c153] : memref<193xf32, #tpu.memory_space<smem>>
    %640 = vector.broadcast %639 : f32 to vector<1x128xf32>
    %641 = arith.mulf %640, %123 : vector<1x128xf32>
    %642 = arith.addf %638, %641 : vector<1x128xf32>
    %c154 = arith.constant 154 : index
    %643 = memref.load %arg1[%c154] : memref<193xf32, #tpu.memory_space<smem>>
    %644 = vector.broadcast %643 : f32 to vector<1x128xf32>
    %645 = arith.mulf %644, %135 : vector<1x128xf32>
    %646 = arith.addf %642, %645 : vector<1x128xf32>
    %c155 = arith.constant 155 : index
    %647 = memref.load %arg1[%c155] : memref<193xf32, #tpu.memory_space<smem>>
    %648 = vector.broadcast %647 : f32 to vector<1x128xf32>
    %649 = arith.mulf %648, %147 : vector<1x128xf32>
    %650 = arith.addf %646, %649 : vector<1x128xf32>
    %c156 = arith.constant 156 : index
    %651 = memref.load %arg1[%c156] : memref<193xf32, #tpu.memory_space<smem>>
    %652 = vector.broadcast %651 : f32 to vector<1x128xf32>
    %653 = arith.mulf %652, %159 : vector<1x128xf32>
    %654 = arith.addf %650, %653 : vector<1x128xf32>
    %c157 = arith.constant 157 : index
    %655 = memref.load %arg1[%c157] : memref<193xf32, #tpu.memory_space<smem>>
    %656 = vector.broadcast %655 : f32 to vector<1x128xf32>
    %657 = arith.mulf %656, %171 : vector<1x128xf32>
    %658 = arith.addf %654, %657 : vector<1x128xf32>
    %c158 = arith.constant 158 : index
    %659 = memref.load %arg1[%c158] : memref<193xf32, #tpu.memory_space<smem>>
    %660 = vector.broadcast %659 : f32 to vector<1x128xf32>
    %661 = arith.mulf %660, %183 : vector<1x128xf32>
    %662 = arith.addf %658, %661 : vector<1x128xf32>
    %c159 = arith.constant 159 : index
    %663 = memref.load %arg1[%c159] : memref<193xf32, #tpu.memory_space<smem>>
    %664 = vector.broadcast %663 : f32 to vector<1x128xf32>
    %665 = arith.mulf %664, %195 : vector<1x128xf32>
    %666 = arith.addf %662, %665 : vector<1x128xf32>
    %c182 = arith.constant 182 : index
    %667 = memref.load %arg1[%c182] : memref<193xf32, #tpu.memory_space<smem>>
    %668 = vector.broadcast %667 : f32 to vector<1x128xf32>
    %669 = arith.addf %666, %668 : vector<1x128xf32>
    %cst_27 = arith.constant 0.000000e+00 : f32
    %670 = vector.broadcast %cst_27 : f32 to vector<1x128xf32>
    %671 = arith.maximumf %669, %670 : vector<1x128xf32>
    %c160 = arith.constant 160 : index
    %672 = memref.load %arg1[%c160] : memref<193xf32, #tpu.memory_space<smem>>
    %673 = vector.broadcast %672 : f32 to vector<1x128xf32>
    %674 = arith.mulf %673, %15 : vector<1x128xf32>
    %c161 = arith.constant 161 : index
    %675 = memref.load %arg1[%c161] : memref<193xf32, #tpu.memory_space<smem>>
    %676 = vector.broadcast %675 : f32 to vector<1x128xf32>
    %677 = arith.mulf %676, %27 : vector<1x128xf32>
    %678 = arith.addf %674, %677 : vector<1x128xf32>
    %c162 = arith.constant 162 : index
    %679 = memref.load %arg1[%c162] : memref<193xf32, #tpu.memory_space<smem>>
    %680 = vector.broadcast %679 : f32 to vector<1x128xf32>
    %681 = arith.mulf %680, %39 : vector<1x128xf32>
    %682 = arith.addf %678, %681 : vector<1x128xf32>
    %c163 = arith.constant 163 : index
    %683 = memref.load %arg1[%c163] : memref<193xf32, #tpu.memory_space<smem>>
    %684 = vector.broadcast %683 : f32 to vector<1x128xf32>
    %685 = arith.mulf %684, %51 : vector<1x128xf32>
    %686 = arith.addf %682, %685 : vector<1x128xf32>
    %c164 = arith.constant 164 : index
    %687 = memref.load %arg1[%c164] : memref<193xf32, #tpu.memory_space<smem>>
    %688 = vector.broadcast %687 : f32 to vector<1x128xf32>
    %689 = arith.mulf %688, %63 : vector<1x128xf32>
    %690 = arith.addf %686, %689 : vector<1x128xf32>
    %c165 = arith.constant 165 : index
    %691 = memref.load %arg1[%c165] : memref<193xf32, #tpu.memory_space<smem>>
    %692 = vector.broadcast %691 : f32 to vector<1x128xf32>
    %693 = arith.mulf %692, %75 : vector<1x128xf32>
    %694 = arith.addf %690, %693 : vector<1x128xf32>
    %c166 = arith.constant 166 : index
    %695 = memref.load %arg1[%c166] : memref<193xf32, #tpu.memory_space<smem>>
    %696 = vector.broadcast %695 : f32 to vector<1x128xf32>
    %697 = arith.mulf %696, %87 : vector<1x128xf32>
    %698 = arith.addf %694, %697 : vector<1x128xf32>
    %c167 = arith.constant 167 : index
    %699 = memref.load %arg1[%c167] : memref<193xf32, #tpu.memory_space<smem>>
    %700 = vector.broadcast %699 : f32 to vector<1x128xf32>
    %701 = arith.mulf %700, %99 : vector<1x128xf32>
    %702 = arith.addf %698, %701 : vector<1x128xf32>
    %c168 = arith.constant 168 : index
    %703 = memref.load %arg1[%c168] : memref<193xf32, #tpu.memory_space<smem>>
    %704 = vector.broadcast %703 : f32 to vector<1x128xf32>
    %705 = arith.mulf %704, %111 : vector<1x128xf32>
    %706 = arith.addf %702, %705 : vector<1x128xf32>
    %c169 = arith.constant 169 : index
    %707 = memref.load %arg1[%c169] : memref<193xf32, #tpu.memory_space<smem>>
    %708 = vector.broadcast %707 : f32 to vector<1x128xf32>
    %709 = arith.mulf %708, %123 : vector<1x128xf32>
    %710 = arith.addf %706, %709 : vector<1x128xf32>
    %c170 = arith.constant 170 : index
    %711 = memref.load %arg1[%c170] : memref<193xf32, #tpu.memory_space<smem>>
    %712 = vector.broadcast %711 : f32 to vector<1x128xf32>
    %713 = arith.mulf %712, %135 : vector<1x128xf32>
    %714 = arith.addf %710, %713 : vector<1x128xf32>
    %c171 = arith.constant 171 : index
    %715 = memref.load %arg1[%c171] : memref<193xf32, #tpu.memory_space<smem>>
    %716 = vector.broadcast %715 : f32 to vector<1x128xf32>
    %717 = arith.mulf %716, %147 : vector<1x128xf32>
    %718 = arith.addf %714, %717 : vector<1x128xf32>
    %c172 = arith.constant 172 : index
    %719 = memref.load %arg1[%c172] : memref<193xf32, #tpu.memory_space<smem>>
    %720 = vector.broadcast %719 : f32 to vector<1x128xf32>
    %721 = arith.mulf %720, %159 : vector<1x128xf32>
    %722 = arith.addf %718, %721 : vector<1x128xf32>
    %c173 = arith.constant 173 : index
    %723 = memref.load %arg1[%c173] : memref<193xf32, #tpu.memory_space<smem>>
    %724 = vector.broadcast %723 : f32 to vector<1x128xf32>
    %725 = arith.mulf %724, %171 : vector<1x128xf32>
    %726 = arith.addf %722, %725 : vector<1x128xf32>
    %c174 = arith.constant 174 : index
    %727 = memref.load %arg1[%c174] : memref<193xf32, #tpu.memory_space<smem>>
    %728 = vector.broadcast %727 : f32 to vector<1x128xf32>
    %729 = arith.mulf %728, %183 : vector<1x128xf32>
    %730 = arith.addf %726, %729 : vector<1x128xf32>
    %c175 = arith.constant 175 : index
    %731 = memref.load %arg1[%c175] : memref<193xf32, #tpu.memory_space<smem>>
    %732 = vector.broadcast %731 : f32 to vector<1x128xf32>
    %733 = arith.mulf %732, %195 : vector<1x128xf32>
    %734 = arith.addf %730, %733 : vector<1x128xf32>
    %c183 = arith.constant 183 : index
    %735 = memref.load %arg1[%c183] : memref<193xf32, #tpu.memory_space<smem>>
    %736 = vector.broadcast %735 : f32 to vector<1x128xf32>
    %737 = arith.addf %734, %736 : vector<1x128xf32>
    %cst_28 = arith.constant 0.000000e+00 : f32
    %738 = vector.broadcast %cst_28 : f32 to vector<1x128xf32>
    %739 = arith.maximumf %737, %738 : vector<1x128xf32>
    %c184 = arith.constant 184 : index
    %740 = memref.load %arg1[%c184] : memref<193xf32, #tpu.memory_space<smem>>
    %741 = vector.broadcast %740 : f32 to vector<1x128xf32>
    %742 = arith.mulf %741, %263 : vector<1x128xf32>
    %c185 = arith.constant 185 : index
    %743 = memref.load %arg1[%c185] : memref<193xf32, #tpu.memory_space<smem>>
    %744 = vector.broadcast %743 : f32 to vector<1x128xf32>
    %745 = arith.mulf %744, %331 : vector<1x128xf32>
    %746 = arith.addf %742, %745 : vector<1x128xf32>
    %c186 = arith.constant 186 : index
    %747 = memref.load %arg1[%c186] : memref<193xf32, #tpu.memory_space<smem>>
    %748 = vector.broadcast %747 : f32 to vector<1x128xf32>
    %749 = arith.mulf %748, %399 : vector<1x128xf32>
    %750 = arith.addf %746, %749 : vector<1x128xf32>
    %c187 = arith.constant 187 : index
    %751 = memref.load %arg1[%c187] : memref<193xf32, #tpu.memory_space<smem>>
    %752 = vector.broadcast %751 : f32 to vector<1x128xf32>
    %753 = arith.mulf %752, %467 : vector<1x128xf32>
    %754 = arith.addf %750, %753 : vector<1x128xf32>
    %c188 = arith.constant 188 : index
    %755 = memref.load %arg1[%c188] : memref<193xf32, #tpu.memory_space<smem>>
    %756 = vector.broadcast %755 : f32 to vector<1x128xf32>
    %757 = arith.mulf %756, %535 : vector<1x128xf32>
    %758 = arith.addf %754, %757 : vector<1x128xf32>
    %c189 = arith.constant 189 : index
    %759 = memref.load %arg1[%c189] : memref<193xf32, #tpu.memory_space<smem>>
    %760 = vector.broadcast %759 : f32 to vector<1x128xf32>
    %761 = arith.mulf %760, %603 : vector<1x128xf32>
    %762 = arith.addf %758, %761 : vector<1x128xf32>
    %c190 = arith.constant 190 : index
    %763 = memref.load %arg1[%c190] : memref<193xf32, #tpu.memory_space<smem>>
    %764 = vector.broadcast %763 : f32 to vector<1x128xf32>
    %765 = arith.mulf %764, %671 : vector<1x128xf32>
    %766 = arith.addf %762, %765 : vector<1x128xf32>
    %c191 = arith.constant 191 : index
    %767 = memref.load %arg1[%c191] : memref<193xf32, #tpu.memory_space<smem>>
    %768 = vector.broadcast %767 : f32 to vector<1x128xf32>
    %769 = arith.mulf %768, %739 : vector<1x128xf32>
    %770 = arith.addf %766, %769 : vector<1x128xf32>
    %c192 = arith.constant 192 : index
    %771 = memref.load %arg1[%c192] : memref<193xf32, #tpu.memory_space<smem>>
    %772 = vector.broadcast %771 : f32 to vector<1x128xf32>
    %773 = arith.addf %770, %772 : vector<1x128xf32>
    %cst_29 = arith.constant 0.000000e+00 : f32
    %774 = vector.broadcast %cst_29 : f32 to vector<1x128xf32>
    %775 = arith.subf %774, %773 : vector<1x128xf32>
    %776 = math.exp %775 : vector<1x128xf32>
    %cst_30 = arith.constant 1.000000e+00 : f32
    %777 = vector.broadcast %cst_30 : f32 to vector<1x128xf32>
    %778 = arith.addf %777, %776 : vector<1x128xf32>
    %779 = tpu.reciprocal %778 {approx = true} : vector<1x128xf32> -> vector<1x128xf32>
    %c0_31 = arith.constant 0 : index
    %c0_32 = arith.constant 0 : index
    %780 = vector.load %arg3[%c0_31, %c0_32] : memref<1x128xf32, #tpu.memory_space<vmem>>, vector<1x128xf32>
    tpu.vector_store %arg3[%c0_31, %c0_32], %779 {strides = array<i32>} : memref<1x128xf32, #tpu.memory_space<vmem>>, vector<1x128xf32>,
    return
  }
  func.func @transform_0(%arg0: i32) -> i32 {
    %c0_i32 = arith.constant 0 : i32
    %c0_i32_0 = arith.constant 0 : i32
    return %c0_i32 : i32
  }
  func.func @transform_1(%arg0: i32) -> (i32, i32, i32) {
    %c0_i32 = arith.constant 0 : i32
    %c0_i32_0 = arith.constant 0 : i32
    %c0_i32_1 = arith.constant 0 : i32
    return %c0_i32, %arg0, %c0_i32_0 : i32, i32, i32
  }
  func.func @transform_2(%arg0: i32) -> (i32, i32) {
    %c0_i32 = arith.constant 0 : i32
    %c0_i32_0 = arith.constant 0 : i32
    return %arg0, %c0_i32 : i32, i32
  }
}

</mosaic_0001>

<llo_original>
// kernel: dual_branch_forward.1
$region0: #{dual_branch_forward.1}
  #allocation0 [shape = 'u32[]', space=smem, size = 0x4, offset = 0x4, fixed_abs, tag = 'smem constant byte address 0x4 - core index']
  #allocation1 [shape = 'u32[72,128]{1,0:T(1,128)}', space=vmem, size = 0x9000, scoped, tag = 'internal scratch']
  %s0 = inlined_call_operand.vmem [shape: f32[193], index: 0, kind: input, shape index: {}]
  %s1 = inlined_call_operand.vmem [shape: f32[2,1,128], index: 1, kind: input, shape index: {}]
  %s2 = inlined_call_operand.vmem [shape: f32[1,128], index: 2, kind: output, shape index: {}]
  %s3 = sld [smem:[#allocation0]]
  $region22: #{dual_branch_forward.1} parent=0
    _
  %s5 = ssub.s32 1, %s3
  %s6 = scalar_select 0, %s5, %s3
  $region1: #{dual_branch_forward.1} parent=0
    #allocation2 [shape = 'u8[1024]{0}', space=smem, size = 0x400, scoped, tag = 'input window, operand 0, single buffered']
    #allocation3 [shape = 's32[1]{0}', space=sflag, size = 0x4, scoped, tag = 'scoped memory for dual_branch_forward.1']
    %7 = vsyncpa [#allocation3], 0
    // Predicated region
    $region2: #{dual_branch_forward.1} parent=1 // pred_check
      _
    $region3: #{dual_branch_forward.1} parent=1 // pred_check_branch
      %9 = sbr.rel (0) target = $region5
    $region4: #{dual_branch_forward.1} parent=1 // pred_region
      %11 = vsyncadd [#allocation3], 0
      %s13 = sshll.u32 %s0, 4
      %s14 = int_to_ptr.vmem [resolvable:$true] %s13
      %16 = dma.vmem_to_smem %s14, 32, [#allocation2], [#allocation3]
    $region5: #{dual_branch_forward.1} parent=1 // pred_fallthru
      _
    // Predicated region
    $region6: #{dual_branch_forward.1} parent=1 // pred_check
      _
    $region7: #{dual_branch_forward.1} parent=1 // pred_check_branch
      %18 = sbr.rel (0) target = $region9
    $region8: #{dual_branch_forward.1} parent=1 // pred_region
      _
    $region9: #{dual_branch_forward.1} parent=1 // pred_fallthru
      _
    // Predicated region
    $region10: #{dual_branch_forward.1} parent=1 // pred_check
      _
    $region11: #{dual_branch_forward.1} parent=1 // pred_check_branch
      %20 = sbr.rel (0) target = $region13
    $region12: #{dual_branch_forward.1} parent=1 // pred_region
      %22 = dma.done [#allocation3], 32
    $region13: #{dual_branch_forward.1} parent=1 // pred_fallthru
      _
    %23 = sfence
    %v24 = vld [vmem:[%s1] sm:$0x1]
    %s25 = scalar_lea.vmem %s1, 1
    %v26 = vld [vmem:[%s25] sm:$0x1]
    %s27 = sld [smem:[#allocation2]]
    %v28 = vstv %s27
    %v29 = vmul.f32 %v28, %v24
    %s30 = sld [smem:[#allocation2 + $0x1]]
    %v31 = vstv %s30
    %v32 = vmul.f32 %v31, %v26
    %v33 = vadd.f32 %v29, %v32
    %s34 = sld [smem:[#allocation2 + $0x20]]
    %v35 = vstv %s34
    %v36 = vadd.f32 %v33, %v35
    %v37 = vmax.f32 %v36, 0.0
    %s38 = sld [smem:[#allocation2 + $0x2]]
    %v39 = vstv %s38
    %v40 = vmul.f32 %v39, %v24
    %s41 = sld [smem:[#allocation2 + $0x3]]
    %v42 = vstv %s41
    %v43 = vmul.f32 %v42, %v26
    %v44 = vadd.f32 %v40, %v43
    %s45 = sld [smem:[#allocation2 + $0x21]]
    %v46 = vstv %s45
    %v47 = vadd.f32 %v44, %v46
    %v48 = vmax.f32 %v47, 0.0
    %s49 = sld [smem:[#allocation2 + $0x4]]
    %v50 = vstv %s49
    %v51 = vmul.f32 %v50, %v24
    %s52 = sld [smem:[#allocation2 + $0x5]]
    %v53 = vstv %s52
    %v54 = vmul.f32 %v53, %v26
    %v55 = vadd.f32 %v51, %v54
    %s56 = sld [smem:[#allocation2 + $0x22]]
    %v57 = vstv %s56
    %v58 = vadd.f32 %v55, %v57
    %v59 = vmax.f32 %v58, 0.0
    %s60 = sld [smem:[#allocation2 + $0x6]]
    %v61 = vstv %s60
    %v62 = vmul.f32 %v61, %v24
    %s63 = sld [smem:[#allocation2 + $0x7]]
    %v64 = vstv %s63
    %v65 = vmul.f32 %v64, %v26
    %v66 = vadd.f32 %v62, %v65
    %s67 = sld [smem:[#allocation2 + $0x23]]
    %v68 = vstv %s67
    %v69 = vadd.f32 %v66, %v68
    %v70 = vmax.f32 %v69, 0.0
    %s71 = sld [smem:[#allocation2 + $0x8]]
    %v72 = vstv %s71
    %v73 = vmul.f32 %v72, %v24
    %s74 = sld [smem:[#allocation2 + $0x9]]
    %v75 = vstv %s74
    %v76 = vmul.f32 %v75, %v26
    %v77 = vadd.f32 %v73, %v76
    %s78 = sld [smem:[#allocation2 + $0x24]]
    %v79 = vstv %s78
    %v80 = vadd.f32 %v77, %v79
    %v81 = vmax.f32 %v80, 0.0
    %s82 = sld [smem:[#allocation2 + $0xa]]
    %v83 = vstv %s82
    %v84 = vmul.f32 %v83, %v24
    %s85 = sld [smem:[#allocation2 + $0xb]]
    %v86 = vstv %s85
    %v87 = vmul.f32 %v86, %v26
    %v88 = vadd.f32 %v84, %v87
    %s89 = sld [smem:[#allocation2 + $0x25]]
    %v90 = vstv %s89
    %v91 = vadd.f32 %v88, %v90
    %v92 = vmax.f32 %v91, 0.0
    %s93 = sld [smem:[#allocation2 + $0xc]]
    %v94 = vstv %s93
    %v95 = vmul.f32 %v94, %v24
    %s96 = sld [smem:[#allocation2 + $0xd]]
    %v97 = vstv %s96
    %v98 = vmul.f32 %v97, %v26
    %v99 = vadd.f32 %v95, %v98
    %s100 = sld [smem:[#allocation2 + $0x26]]
    %v101 = vstv %s100
    %v102 = vadd.f32 %v99, %v101
    %v103 = vmax.f32 %v102, 0.0
    %s104 = sld [smem:[#allocation2 + $0xe]]
    %v105 = vstv %s104
    %v106 = vmul.f32 %v105, %v24
    %s107 = sld [smem:[#allocation2 + $0xf]]
    %v108 = vstv %s107
    %v109 = vmul.f32 %v108, %v26
    %v110 = vadd.f32 %v106, %v109
    %s111 = sld [smem:[#allocation2 + $0x27]]
    %v112 = vstv %s111
    %v113 = vadd.f32 %v110, %v112
    %v114 = vmax.f32 %v113, 0.0
    %s115 = sld [smem:[#allocation2 + $0x10]]
    %v116 = vstv %s115
    %v117 = vmul.f32 %v116, %v24
    %s118 = sld [smem:[#allocation2 + $0x11]]
    %v119 = vstv %s118
    %v120 = vmul.f32 %v119, %v26
    %v121 = vadd.f32 %v117, %v120
    %s122 = sld [smem:[#allocation2 + $0x28]]
    %v123 = vstv %s122
    %v124 = vadd.f32 %v121, %v123
    %v125 = vmax.f32 %v124, 0.0
    %s126 = sld [smem:[#allocation2 + $0x12]]
    %v127 = vstv %s126
    %v128 = vmul.f32 %v127, %v24
    %s129 = sld [smem:[#allocation2 + $0x13]]
    %v130 = vstv %s129
    %v131 = vmul.f32 %v130, %v26
    %v132 = vadd.f32 %v128, %v131
    %s133 = sld [smem:[#allocation2 + $0x29]]
    %v134 = vstv %s133
    %v135 = vadd.f32 %v132, %v134
    %v136 = vmax.f32 %v135, 0.0
    %s137 = sld [smem:[#allocation2 + $0x14]]
    %v138 = vstv %s137
    %v139 = vmul.f32 %v138, %v24
    %s140 = sld [smem:[#allocation2 + $0x15]]
    %v141 = vstv %s140
    %v142 = vmul.f32 %v141, %v26
    %v143 = vadd.f32 %v139, %v142
    %s144 = sld [smem:[#allocation2 + $0x2a]]
    %v145 = vstv %s144
    %v146 = vadd.f32 %v143, %v145
    %v147 = vmax.f32 %v146, 0.0
    %s148 = sld [smem:[#allocation2 + $0x16]]
    %v149 = vstv %s148
    %v150 = vmul.f32 %v149, %v24
    %s151 = sld [smem:[#allocation2 + $0x17]]
    %v152 = vstv %s151
    %v153 = vmul.f32 %v152, %v26
    %v154 = vadd.f32 %v150, %v153
    %s155 = sld [smem:[#allocation2 + $0x2b]]
    %v156 = vstv %s155
    %v157 = vadd.f32 %v154, %v156
    %v158 = vmax.f32 %v157, 0.0
    %s159 = sld [smem:[#allocation2 + $0x18]]
    %v160 = vstv %s159
    %v161 = vmul.f32 %v160, %v24
    %s162 = sld [smem:[#allocation2 + $0x19]]
    %v163 = vstv %s162
    %v164 = vmul.f32 %v163, %v26
    %v165 = vadd.f32 %v161, %v164
    %s166 = sld [smem:[#allocation2 + $0x2c]]
    %v167 = vstv %s166
    %v168 = vadd.f32 %v165, %v167
    %v169 = vmax.f32 %v168, 0.0
    %s170 = sld [smem:[#allocation2 + $0x1a]]
    %v171 = vstv %s170
    %v172 = vmul.f32 %v171, %v24
    %s173 = sld [smem:[#allocation2 + $0x1b]]
    %v174 = vstv %s173
    %v175 = vmul.f32 %v174, %v26
    %v176 = vadd.f32 %v172, %v175
    %s177 = sld [smem:[#allocation2 + $0x2d]]
    %v178 = vstv %s177
    %v179 = vadd.f32 %v176, %v178
    %v180 = vmax.f32 %v179, 0.0
    %s181 = sld [smem:[#allocation2 + $0x1c]]
    %v182 = vstv %s181
    %v183 = vmul.f32 %v182, %v24
    %s184 = sld [smem:[#allocation2 + $0x1d]]
    %v185 = vstv %s184
    %v186 = vmul.f32 %v185, %v26
    %v187 = vadd.f32 %v183, %v186
    %s188 = sld [smem:[#allocation2 + $0x2e]]
    %v189 = vstv %s188
    %v190 = vadd.f32 %v187, %v189
    %v191 = vmax.f32 %v190, 0.0
    %s192 = sld [smem:[#allocation2 + $0x1e]]
    %v193 = vstv %s192
    %v194 = vmul.f32 %v193, %v24
    %s195 = sld [smem:[#allocation2 + $0x1f]]
    %v196 = vstv %s195
    %v197 = vmul.f32 %v196, %v26
    %v198 = vadd.f32 %v194, %v197
    %s199 = sld [smem:[#allocation2 + $0x2f]]
    %v200 = vstv %s199
    %v201 = vadd.f32 %v198, %v200
    %v202 = vmax.f32 %v201, 0.0
    %s203 = sld [smem:[#allocation2 + $0x30]]
    %v204 = vstv %s203
    %v205 = vmul.f32 %v204, %v37
    %s206 = sld [smem:[#allocation2 + $0x31]]
    %v207 = vstv %s206
    %v208 = vmul.f32 %v207, %v48
    %v209 = vadd.f32 %v205, %v208
    %s210 = sld [smem:[#allocation2 + $0x32]]
    %v211 = vstv %s210
    %v212 = vmul.f32 %v211, %v59
    %v213 = vadd.f32 %v209, %v212
    %s214 = sld [smem:[#allocation2 + $0x33]]
    %v215 = vstv %s214
    %v216 = vmul.f32 %v215, %v70
    %v217 = vadd.f32 %v213, %v216
    %s218 = sld [smem:[#allocation2 + $0x34]]
    %v219 = vstv %s218
    %v220 = vmul.f32 %v219, %v81
    %v221 = vadd.f32 %v217, %v220
    %s222 = sld [smem:[#allocation2 + $0x35]]
    %v223 = vstv %s222
    %v224 = vmul.f32 %v223, %v92
    %v225 = vadd.f32 %v221, %v224
    %s226 = sld [smem:[#allocation2 + $0x36]]
    %v227 = vstv %s226
    %v228 = vmul.f32 %v227, %v103
    %v229 = vadd.f32 %v225, %v228
    %s230 = sld [smem:[#allocation2 + $0x37]]
    %v231 = vstv %s230
    %v232 = vmul.f32 %v231, %v114
    %v233 = vadd.f32 %v229, %v232
    %s234 = sld [smem:[#allocation2 + $0x38]]
    %v235 = vstv %s234
    %v236 = vmul.f32 %v235, %v125
    %v237 = vadd.f32 %v233, %v236
    %s238 = sld [smem:[#allocation2 + $0x39]]
    %v239 = vstv %s238
    %v240 = vmul.f32 %v239, %v136
    %v241 = vadd.f32 %v237, %v240
    %s242 = sld [smem:[#allocation2 + $0x3a]]
    %v243 = vstv %s242
    %v244 = vmul.f32 %v243, %v147
    %v245 = vadd.f32 %v241, %v244
    %s246 = sld [smem:[#allocation2 + $0x3b]]
    %v247 = vstv %s246
    %v248 = vmul.f32 %v247, %v158
    %v249 = vadd.f32 %v245, %v248
    %s250 = sld [smem:[#allocation2 + $0x3c]]
    %v251 = vstv %s250
    %v252 = vmul.f32 %v251, %v169
    %v253 = vadd.f32 %v249, %v252
    %s254 = sld [smem:[#allocation2 + $0x3d]]
    %v255 = vstv %s254
    %v256 = vmul.f32 %v255, %v180
    %v257 = vadd.f32 %v253, %v256
    %s258 = sld [smem:[#allocation2 + $0x3e]]
    %v259 = vstv %s258
    %v260 = vmul.f32 %v259, %v191
    %v261 = vadd.f32 %v257, %v260
    %s262 = sld [smem:[#allocation2 + $0x3f]]
    %v263 = vstv %s262
    %v264 = vmul.f32 %v263, %v202
    %v265 = vadd.f32 %v261, %v264
    %s266 = sld [smem:[#allocation2 + $0xb0]]
    %v267 = vstv %s266
    %v268 = vadd.f32 %v265, %v267
    %v269 = vmax.f32 %v268, 0.0
    %s270 = sld [smem:[#allocation2 + $0x40]]
    %v271 = vstv %s270
    %v272 = vmul.f32 %v271, %v37
    %s273 = sld [smem:[#allocation2 + $0x41]]
    %v274 = vstv %s273
    %v275 = vmul.f32 %v274, %v48
    %v276 = vadd.f32 %v272, %v275
    %s277 = sld [smem:[#allocation2 + $0x42]]
    %v278 = vstv %s277
    %v279 = vmul.f32 %v278, %v59
    %v280 = vadd.f32 %v276, %v279
    %s281 = sld [smem:[#allocation2 + $0x43]]
    %v282 = vstv %s281
    %v283 = vmul.f32 %v282, %v70
    %v284 = vadd.f32 %v280, %v283
    %s285 = sld [smem:[#allocation2 + $0x44]]
    %v286 = vstv %s285
    %v287 = vmul.f32 %v286, %v81
    %v288 = vadd.f32 %v284, %v287
    %s289 = sld [smem:[#allocation2 + $0x45]]
    %v290 = vstv %s289
    %v291 = vmul.f32 %v290, %v92
    %v292 = vadd.f32 %v288, %v291
    %s293 = sld [smem:[#allocation2 + $0x46]]
    %v294 = vstv %s293
    %v295 = vmul.f32 %v294, %v103
    %v296 = vadd.f32 %v292, %v295
    %s297 = sld [smem:[#allocation2 + $0x47]]
    %v298 = vstv %s297
    %v299 = vmul.f32 %v298, %v114
    %v300 = vadd.f32 %v296, %v299
    %s301 = sld [smem:[#allocation2 + $0x48]]
    %v302 = vstv %s301
    %v303 = vmul.f32 %v302, %v125
    %v304 = vadd.f32 %v300, %v303
    %s305 = sld [smem:[#allocation2 + $0x49]]
    %v306 = vstv %s305
    %v307 = vmul.f32 %v306, %v136
    %v308 = vadd.f32 %v304, %v307
    %s309 = sld [smem:[#allocation2 + $0x4a]]
    %v310 = vstv %s309
    %v311 = vmul.f32 %v310, %v147
    %v312 = vadd.f32 %v308, %v311
    %s313 = sld [smem:[#allocation2 + $0x4b]]
    %v314 = vstv %s313
    %v315 = vmul.f32 %v314, %v158
    %v316 = vadd.f32 %v312, %v315
    %s317 = sld [smem:[#allocation2 + $0x4c]]
    %v318 = vstv %s317
    %v319 = vmul.f32 %v318, %v169
    %v320 = vadd.f32 %v316, %v319
    %s321 = sld [smem:[#allocation2 + $0x4d]]
    %v322 = vstv %s321
    %v323 = vmul.f32 %v322, %v180
    %v324 = vadd.f32 %v320, %v323
    %s325 = sld [smem:[#allocation2 + $0x4e]]
    %v326 = vstv %s325
    %v327 = vmul.f32 %v326, %v191
    %v328 = vadd.f32 %v324, %v327
    %s329 = sld [smem:[#allocation2 + $0x4f]]
    %v330 = vstv %s329
    %v331 = vmul.f32 %v330, %v202
    %v332 = vadd.f32 %v328, %v331
    %s333 = sld [smem:[#allocation2 + $0xb1]]
    %v334 = vstv %s333
    %v335 = vadd.f32 %v332, %v334
    %v336 = vmax.f32 %v335, 0.0
    %s337 = sld [smem:[#allocation2 + $0x50]]
    %v338 = vstv %s337
    %v339 = vmul.f32 %v338, %v37
    %s340 = sld [smem:[#allocation2 + $0x51]]
    %v341 = vstv %s340
    %v342 = vmul.f32 %v341, %v48
    %v343 = vadd.f32 %v339, %v342
    %s344 = sld [smem:[#allocation2 + $0x52]]
    %v345 = vstv %s344
    %v346 = vmul.f32 %v345, %v59
    %v347 = vadd.f32 %v343, %v346
    %s348 = sld [smem:[#allocation2 + $0x53]]
    %v349 = vstv %s348
    %v350 = vmul.f32 %v349, %v70
    %v351 = vadd.f32 %v347, %v350
    %s352 = sld [smem:[#allocation2 + $0x54]]
    %v353 = vstv %s352
    %v354 = vmul.f32 %v353, %v81
    %v355 = vadd.f32 %v351, %v354
    %s356 = sld [smem:[#allocation2 + $0x55]]
    %v357 = vstv %s356
    %v358 = vmul.f32 %v357, %v92
    %v359 = vadd.f32 %v355, %v358
    %s360 = sld [smem:[#allocation2 + $0x56]]
    %v361 = vstv %s360
    %v362 = vmul.f32 %v361, %v103
    %v363 = vadd.f32 %v359, %v362
    %s364 = sld [smem:[#allocation2 + $0x57]]
    %v365 = vstv %s364
    %v366 = vmul.f32 %v365, %v114
    %v367 = vadd.f32 %v363, %v366
    %s368 = sld [smem:[#allocation2 + $0x58]]
    %v369 = vstv %s368
    %v370 = vmul.f32 %v369, %v125
    %v371 = vadd.f32 %v367, %v370
    %s372 = sld [smem:[#allocation2 + $0x59]]
    %v373 = vstv %s372
    %v374 = vmul.f32 %v373, %v136
    %v375 = vadd.f32 %v371, %v374
    %s376 = sld [smem:[#allocation2 + $0x5a]]
    %v377 = vstv %s376
    %v378 = vmul.f32 %v377, %v147
    %v379 = vadd.f32 %v375, %v378
    %s380 = sld [smem:[#allocation2 + $0x5b]]
    %v381 = vstv %s380
    %v382 = vmul.f32 %v381, %v158
    %v383 = vadd.f32 %v379, %v382
    %s384 = sld [smem:[#allocation2 + $0x5c]]
    %v385 = vstv %s384
    %v386 = vmul.f32 %v385, %v169
    %v387 = vadd.f32 %v383, %v386
    %s388 = sld [smem:[#allocation2 + $0x5d]]
    %v389 = vstv %s388
    %v390 = vmul.f32 %v389, %v180
    %v391 = vadd.f32 %v387, %v390
    %s392 = sld [smem:[#allocation2 + $0x5e]]
    %v393 = vstv %s392
    %v394 = vmul.f32 %v393, %v191
    %v395 = vadd.f32 %v391, %v394
    %s396 = sld [smem:[#allocation2 + $0x5f]]
    %v397 = vstv %s396
    %v398 = vmul.f32 %v397, %v202
    %v399 = vadd.f32 %v395, %v398
    %s400 = sld [smem:[#allocation2 + $0xb2]]
    %v401 = vstv %s400
    %v402 = vadd.f32 %v399, %v401
    %v403 = vmax.f32 %v402, 0.0
    %s404 = sld [smem:[#allocation2 + $0x60]]
    %v405 = vstv %s404
    %v406 = vmul.f32 %v405, %v37
    %s407 = sld [smem:[#allocation2 + $0x61]]
    %v408 = vstv %s407
    %v409 = vmul.f32 %v408, %v48
    %v410 = vadd.f32 %v406, %v409
    %s411 = sld [smem:[#allocation2 + $0x62]]
    %v412 = vstv %s411
    %v413 = vmul.f32 %v412, %v59
    %v414 = vadd.f32 %v410, %v413
    %s415 = sld [smem:[#allocation2 + $0x63]]
    %v416 = vstv %s415
    %v417 = vmul.f32 %v416, %v70
    %v418 = vadd.f32 %v414, %v417
    %s419 = sld [smem:[#allocation2 + $0x64]]
    %v420 = vstv %s419
    %v421 = vmul.f32 %v420, %v81
    %v422 = vadd.f32 %v418, %v421
    %s423 = sld [smem:[#allocation2 + $0x65]]
    %v424 = vstv %s423
    %v425 = vmul.f32 %v424, %v92
    %v426 = vadd.f32 %v422, %v425
    %s427 = sld [smem:[#allocation2 + $0x66]]
    %v428 = vstv %s427
    %v429 = vmul.f32 %v428, %v103
    %v430 = vadd.f32 %v426, %v429
    %s431 = sld [smem:[#allocation2 + $0x67]]
    %v432 = vstv %s431
    %v433 = vmul.f32 %v432, %v114
    %v434 = vadd.f32 %v430, %v433
    %s435 = sld [smem:[#allocation2 + $0x68]]
    %v436 = vstv %s435
    %v437 = vmul.f32 %v436, %v125
    %v438 = vadd.f32 %v434, %v437
    %s439 = sld [smem:[#allocation2 + $0x69]]
    %v440 = vstv %s439
    %v441 = vmul.f32 %v440, %v136
    %v442 = vadd.f32 %v438, %v441
    %s443 = sld [smem:[#allocation2 + $0x6a]]
    %v444 = vstv %s443
    %v445 = vmul.f32 %v444, %v147
    %v446 = vadd.f32 %v442, %v445
    %s447 = sld [smem:[#allocation2 + $0x6b]]
    %v448 = vstv %s447
    %v449 = vmul.f32 %v448, %v158
    %v450 = vadd.f32 %v446, %v449
    %s451 = sld [smem:[#allocation2 + $0x6c]]
    %v452 = vstv %s451
    %v453 = vmul.f32 %v452, %v169
    %v454 = vadd.f32 %v450, %v453
    %s455 = sld [smem:[#allocation2 + $0x6d]]
    %v456 = vstv %s455
    %v457 = vmul.f32 %v456, %v180
    %v458 = vadd.f32 %v454, %v457
    %s459 = sld [smem:[#allocation2 + $0x6e]]
    %v460 = vstv %s459
    %v461 = vmul.f32 %v460, %v191
    %v462 = vadd.f32 %v458, %v461
    %s463 = sld [smem:[#allocation2 + $0x6f]]
    %v464 = vstv %s463
    %v465 = vmul.f32 %v464, %v202
    %v466 = vadd.f32 %v462, %v465
    %s467 = sld [smem:[#allocation2 + $0xb3]]
    %v468 = vstv %s467
    %v469 = vadd.f32 %v466, %v468
    %v470 = vmax.f32 %v469, 0.0
    %s471 = sld [smem:[#allocation2 + $0x70]]
    %v472 = vstv %s471
    %v473 = vmul.f32 %v472, %v37
    %s474 = sld [smem:[#allocation2 + $0x71]]
    %v475 = vstv %s474
    %v476 = vmul.f32 %v475, %v48
    %v477 = vadd.f32 %v473, %v476
    %s478 = sld [smem:[#allocation2 + $0x72]]
    %v479 = vstv %s478
    %v480 = vmul.f32 %v479, %v59
    %v481 = vadd.f32 %v477, %v480
    %s482 = sld [smem:[#allocation2 + $0x73]]
    %v483 = vstv %s482
    %v484 = vmul.f32 %v483, %v70
    %v485 = vadd.f32 %v481, %v484
    %s486 = sld [smem:[#allocation2 + $0x74]]
    %v487 = vstv %s486
    %v488 = vmul.f32 %v487, %v81
    %v489 = vadd.f32 %v485, %v488
    %s490 = sld [smem:[#allocation2 + $0x75]]
    %v491 = vstv %s490
    %v492 = vmul.f32 %v491, %v92
    %v493 = vadd.f32 %v489, %v492
    %s494 = sld [smem:[#allocation2 + $0x76]]
    %v495 = vstv %s494
    %v496 = vmul.f32 %v495, %v103
    %v497 = vadd.f32 %v493, %v496
    %s498 = sld [smem:[#allocation2 + $0x77]]
    %v499 = vstv %s498
    %v500 = vmul.f32 %v499, %v114
    %v501 = vadd.f32 %v497, %v500
    %s502 = sld [smem:[#allocation2 + $0x78]]
    %v503 = vstv %s502
    %v504 = vmul.f32 %v503, %v125
    %v505 = vadd.f32 %v501, %v504
    %s506 = sld [smem:[#allocation2 + $0x79]]
    %v507 = vstv %s506
    %v508 = vmul.f32 %v507, %v136
    %v509 = vadd.f32 %v505, %v508
    %s510 = sld [smem:[#allocation2 + $0x7a]]
    %v511 = vstv %s510
    %v512 = vmul.f32 %v511, %v147
    %v513 = vadd.f32 %v509, %v512
    %s514 = sld [smem:[#allocation2 + $0x7b]]
    %v515 = vstv %s514
    %v516 = vmul.f32 %v515, %v158
    %v517 = vadd.f32 %v513, %v516
    %s518 = sld [smem:[#allocation2 + $0x7c]]
    %v519 = vstv %s518
    %v520 = vmul.f32 %v519, %v169
    %v521 = vadd.f32 %v517, %v520
    %s522 = sld [smem:[#allocation2 + $0x7d]]
    %v523 = vstv %s522
    %v524 = vmul.f32 %v523, %v180
    %v525 = vadd.f32 %v521, %v524
    %s526 = sld [smem:[#allocation2 + $0x7e]]
    %v527 = vstv %s526
    %v528 = vmul.f32 %v527, %v191
    %v529 = vadd.f32 %v525, %v528
    %s530 = sld [smem:[#allocation2 + $0x7f]]
    %v531 = vstv %s530
    %v532 = vmul.f32 %v531, %v202
    %v533 = vadd.f32 %v529, %v532
    %s534 = sld [smem:[#allocation2 + $0xb4]]
    %v535 = vstv %s534
    %v536 = vadd.f32 %v533, %v535
    %v537 = vmax.f32 %v536, 0.0
    %s538 = sld [smem:[#allocation2 + $0x80]]
    %v539 = vstv %s538
    %v540 = vmul.f32 %v539, %v37
    %s541 = sld [smem:[#allocation2 + $0x81]]
    %v542 = vstv %s541
    %v543 = vmul.f32 %v542, %v48
    %v544 = vadd.f32 %v540, %v543
    %s545 = sld [smem:[#allocation2 + $0x82]]
    %v546 = vstv %s545
    %v547 = vmul.f32 %v546, %v59
    %v548 = vadd.f32 %v544, %v547
    %s549 = sld [smem:[#allocation2 + $0x83]]
    %v550 = vstv %s549
    %v551 = vmul.f32 %v550, %v70
    %v552 = vadd.f32 %v548, %v551
    %s553 = sld [smem:[#allocation2 + $0x84]]
    %v554 = vstv %s553
    %v555 = vmul.f32 %v554, %v81
    %v556 = vadd.f32 %v552, %v555
    %s557 = sld [smem:[#allocation2 + $0x85]]
    %v558 = vstv %s557
    %v559 = vmul.f32 %v558, %v92
    %v560 = vadd.f32 %v556, %v559
    %s561 = sld [smem:[#allocation2 + $0x86]]
    %v562 = vstv %s561
    %v563 = vmul.f32 %v562, %v103
    %v564 = vadd.f32 %v560, %v563
    %s565 = sld [smem:[#allocation2 + $0x87]]
    %v566 = vstv %s565
    %v567 = vmul.f32 %v566, %v114
    %v568 = vadd.f32 %v564, %v567
    %s569 = sld [smem:[#allocation2 + $0x88]]
    %v570 = vstv %s569
    %v571 = vmul.f32 %v570, %v125
    %v572 = vadd.f32 %v568, %v571
    %s573 = sld [smem:[#allocation2 + $0x89]]
    %v574 = vstv %s573
    %v575 = vmul.f32 %v574, %v136
    %v576 = vadd.f32 %v572, %v575
    %s577 = sld [smem:[#allocation2 + $0x8a]]
    %v578 = vstv %s577
    %v579 = vmul.f32 %v578, %v147
    %v580 = vadd.f32 %v576, %v579
    %s581 = sld [smem:[#allocation2 + $0x8b]]
    %v582 = vstv %s581
    %v583 = vmul.f32 %v582, %v158
    %v584 = vadd.f32 %v580, %v583
    %s585 = sld [smem:[#allocation2 + $0x8c]]
    %v586 = vstv %s585
    %v587 = vmul.f32 %v586, %v169
    %v588 = vadd.f32 %v584, %v587
    %s589 = sld [smem:[#allocation2 + $0x8d]]
    %v590 = vstv %s589
    %v591 = vmul.f32 %v590, %v180
    %v592 = vadd.f32 %v588, %v591
    %s593 = sld [smem:[#allocation2 + $0x8e]]
    %v594 = vstv %s593
    %v595 = vmul.f32 %v594, %v191
    %v596 = vadd.f32 %v592, %v595
    %s597 = sld [smem:[#allocation2 + $0x8f]]
    %v598 = vstv %s597
    %v599 = vmul.f32 %v598, %v202
    %v600 = vadd.f32 %v596, %v599
    %s601 = sld [smem:[#allocation2 + $0xb5]]
    %v602 = vstv %s601
    %v603 = vadd.f32 %v600, %v602
    %v604 = vmax.f32 %v603, 0.0
    %s605 = sld [smem:[#allocation2 + $0x90]]
    %v606 = vstv %s605
    %v607 = vmul.f32 %v606, %v37
    %s608 = sld [smem:[#allocation2 + $0x91]]
    %v609 = vstv %s608
    %v610 = vmul.f32 %v609, %v48
    %v611 = vadd.f32 %v607, %v610
    %s612 = sld [smem:[#allocation2 + $0x92]]
    %v613 = vstv %s612
    %v614 = vmul.f32 %v613, %v59
    %v615 = vadd.f32 %v611, %v614
    %s616 = sld [smem:[#allocation2 + $0x93]]
    %v617 = vstv %s616
    %v618 = vmul.f32 %v617, %v70
    %v619 = vadd.f32 %v615, %v618
    %s620 = sld [smem:[#allocation2 + $0x94]]
    %v621 = vstv %s620
    %v622 = vmul.f32 %v621, %v81
    %v623 = vadd.f32 %v619, %v622
    %s624 = sld [smem:[#allocation2 + $0x95]]
    %v625 = vstv %s624
    %v626 = vmul.f32 %v625, %v92
    %v627 = vadd.f32 %v623, %v626
    %s628 = sld [smem:[#allocation2 + $0x96]]
    %v629 = vstv %s628
    %v630 = vmul.f32 %v629, %v103
    %v631 = vadd.f32 %v627, %v630
    %s632 = sld [smem:[#allocation2 + $0x97]]
    %v633 = vstv %s632
    %v634 = vmul.f32 %v633, %v114
    %v635 = vadd.f32 %v631, %v634
    %s636 = sld [smem:[#allocation2 + $0x98]]
    %v637 = vstv %s636
    %v638 = vmul.f32 %v637, %v125
    %v639 = vadd.f32 %v635, %v638
    %s640 = sld [smem:[#allocation2 + $0x99]]
    %v641 = vstv %s640
    %v642 = vmul.f32 %v641, %v136
    %v643 = vadd.f32 %v639, %v642
    %s644 = sld [smem:[#allocation2 + $0x9a]]
    %v645 = vstv %s644
    %v646 = vmul.f32 %v645, %v147
    %v647 = vadd.f32 %v643, %v646
    %s648 = sld [smem:[#allocation2 + $0x9b]]
    %v649 = vstv %s648
    %v650 = vmul.f32 %v649, %v158
    %v651 = vadd.f32 %v647, %v650
    %s652 = sld [smem:[#allocation2 + $0x9c]]
    %v653 = vstv %s652
    %v654 = vmul.f32 %v653, %v169
    %v655 = vadd.f32 %v651, %v654
    %s656 = sld [smem:[#allocation2 + $0x9d]]
    %v657 = vstv %s656
    %v658 = vmul.f32 %v657, %v180
    %v659 = vadd.f32 %v655, %v658
    %s660 = sld [smem:[#allocation2 + $0x9e]]
    %v661 = vstv %s660
    %v662 = vmul.f32 %v661, %v191
    %v663 = vadd.f32 %v659, %v662
    %s664 = sld [smem:[#allocation2 + $0x9f]]
    %v665 = vstv %s664
    %v666 = vmul.f32 %v665, %v202
    %v667 = vadd.f32 %v663, %v666
    %s668 = sld [smem:[#allocation2 + $0xb6]]
    %v669 = vstv %s668
    %v670 = vadd.f32 %v667, %v669
    %v671 = vmax.f32 %v670, 0.0
    %s672 = sld [smem:[#allocation2 + $0xa0]]
    %v673 = vstv %s672
    %v674 = vmul.f32 %v673, %v37
    %s675 = sld [smem:[#allocation2 + $0xa1]]
    %v676 = vstv %s675
    %v677 = vmul.f32 %v676, %v48
    %v678 = vadd.f32 %v674, %v677
    %s679 = sld [smem:[#allocation2 + $0xa2]]
    %v680 = vstv %s679
    %v681 = vmul.f32 %v680, %v59
    %v682 = vadd.f32 %v678, %v681
    %s683 = sld [smem:[#allocation2 + $0xa3]]
    %v684 = vstv %s683
    %v685 = vmul.f32 %v684, %v70
    %v686 = vadd.f32 %v682, %v685
    %s687 = sld [smem:[#allocation2 + $0xa4]]
    %v688 = vstv %s687
    %v689 = vmul.f32 %v688, %v81
    %v690 = vadd.f32 %v686, %v689
    %s691 = sld [smem:[#allocation2 + $0xa5]]
    %v692 = vstv %s691
    %v693 = vmul.f32 %v692, %v92
    %v694 = vadd.f32 %v690, %v693
    %s695 = sld [smem:[#allocation2 + $0xa6]]
    %v696 = vstv %s695
    %v697 = vmul.f32 %v696, %v103
    %v698 = vadd.f32 %v694, %v697
    %s699 = sld [smem:[#allocation2 + $0xa7]]
    %v700 = vstv %s699
    %v701 = vmul.f32 %v700, %v114
    %v702 = vadd.f32 %v698, %v701
    %s703 = sld [smem:[#allocation2 + $0xa8]]
    %v704 = vstv %s703
    %v705 = vmul.f32 %v704, %v125
    %v706 = vadd.f32 %v702, %v705
    %s707 = sld [smem:[#allocation2 + $0xa9]]
    %v708 = vstv %s707
    %v709 = vmul.f32 %v708, %v136
    %v710 = vadd.f32 %v706, %v709
    %s711 = sld [smem:[#allocation2 + $0xaa]]
    %v712 = vstv %s711
    %v713 = vmul.f32 %v712, %v147
    %v714 = vadd.f32 %v710, %v713
    %s715 = sld [smem:[#allocation2 + $0xab]]
    %v716 = vstv %s715
    %v717 = vmul.f32 %v716, %v158
    %v718 = vadd.f32 %v714, %v717
    %s719 = sld [smem:[#allocation2 + $0xac]]
    %v720 = vstv %s719
    %v721 = vmul.f32 %v720, %v169
    %v722 = vadd.f32 %v718, %v721
    %s723 = sld [smem:[#allocation2 + $0xad]]
    %v724 = vstv %s723
    %v725 = vmul.f32 %v724, %v180
    %v726 = vadd.f32 %v722, %v725
    %s727 = sld [smem:[#allocation2 + $0xae]]
    %v728 = vstv %s727
    %v729 = vmul.f32 %v728, %v191
    %v730 = vadd.f32 %v726, %v729
    %s731 = sld [smem:[#allocation2 + $0xaf]]
    %v732 = vstv %s731
    %v733 = vmul.f32 %v732, %v202
    %v734 = vadd.f32 %v730, %v733
    %s735 = sld [smem:[#allocation2 + $0xb7]]
    %v736 = vstv %s735
    %v737 = vadd.f32 %v734, %v736
    %v738 = vmax.f32 %v737, 0.0
    %s739 = sld [smem:[#allocation2 + $0xb8]]
    %v740 = vstv %s739
    %v741 = vmul.f32 %v740, %v269
    %s742 = sld [smem:[#allocation2 + $0xb9]]
    %v743 = vstv %s742
    %v744 = vmul.f32 %v743, %v336
    %v745 = vadd.f32 %v741, %v744
    %s746 = sld [smem:[#allocation2 + $0xba]]
    %v747 = vstv %s746
    %v748 = vmul.f32 %v747, %v403
    %v749 = vadd.f32 %v745, %v748
    %s750 = sld [smem:[#allocation2 + $0xbb]]
    %v751 = vstv %s750
    %v752 = vmul.f32 %v751, %v470
    %v753 = vadd.f32 %v749, %v752
    %s754 = sld [smem:[#allocation2 + $0xbc]]
    %v755 = vstv %s754
    %v756 = vmul.f32 %v755, %v537
    %v757 = vadd.f32 %v753, %v756
    %s758 = sld [smem:[#allocation2 + $0xbd]]
    %v759 = vstv %s758
    %v760 = vmul.f32 %v759, %v604
    %v761 = vadd.f32 %v757, %v760
    %s762 = sld [smem:[#allocation2 + $0xbe]]
    %v763 = vstv %s762
    %v764 = vmul.f32 %v763, %v671
    %v765 = vadd.f32 %v761, %v764
    %s766 = sld [smem:[#allocation2 + $0xbf]]
    %v767 = vstv %s766
    %v768 = vmul.f32 %v767, %v738
    %v769 = vadd.f32 %v765, %v768
    %s770 = sld [smem:[#allocation2 + $0xc0]]
    %v771 = vstv %s770
    %v772 = vadd.f32 %v769, %v771
    %v773 = vsub.f32 0.0, %v772
    %v774 = vmul.f32 %v773, 1.442695
    %v775 = vpow.pop %v774
    %v776 = vadd.f32 %v775, 1.0
    %v777 = vrcp.pop %v776
    %778 = vst [vmem:[%s2] sm:$0x1] %v777
    // Predicated region
    $region14: #{dual_branch_forward.1} parent=1 // pred_check
      _
    $region15: #{dual_branch_forward.1} parent=1 // pred_check_branch
      %780 = sbr.rel (0) target = $region17
    $region16: #{dual_branch_forward.1} parent=1 // pred_region
      _
    $region17: #{dual_branch_forward.1} parent=1 // pred_fallthru
      _
    // Predicated region
    $region18: #{dual_branch_forward.1} parent=1 // pred_check
      _
    $region19: #{dual_branch_forward.1} parent=1 // pred_check_branch
      %782 = sbr.rel (0) target = $region21
    $region20: #{dual_branch_forward.1} parent=1 // pred_region
      _
    $region21: #{dual_branch_forward.1} parent=1 // pred_fallthru
      _
    %783 = vsyncpa [#allocation3], 1

</llo_original>
